<compile_context>
chip_gen: v6e
topology: v6e:2x2x1
jax: 0.10.0
libtpu: 0.0.40
codegen_flags: <defaults>
</compile_context>

<pallas_src>
import functools

import jax
import jax.numpy as jnp
import numpy as np
from jax.experimental import pallas as pl
from jax.experimental.pallas import tpu as pltpu

# SELU constants (match torch.nn.SELU)
_SELU_ALPHA = 1.6732632423543772848170429916717
_SELU_SCALE = 1.0507009873554804934193349852946

_LANE = 128   # lane width
_SUB = 16     # batch-tile sublane granularity (bf16-safe: packs (16,128))


def _round_up(x, m):
    return (x + m - 1) // m * m


def _cdiv(a, b):
    return (a + b - 1) // b


def _selu(x):
    # scale * (max(0,x) + min(0, alpha*(exp(x)-1))); clamp exp arg so the
    # unused branch of jnp.where cannot overflow.
    neg = _SELU_ALPHA * (jnp.exp(jnp.minimum(x, 0.0)) - 1.0)
    return _SELU_SCALE * jnp.where(x > 0.0, x, neg)


# ---------------------------------------------------------------------------
# Kernel
# ---------------------------------------------------------------------------
def _vae_kernel(half_p, hid_p, lat_p, dout_p,
                x_ref, eps_ref,
                w1_ref, w2_ref, wmulv_ref, wd1_ref, wd2_ref, wdh_ref, ws2_ref,
                bias_ref,
                xhat_ref, mulv_ref):
    f32 = jnp.float32

    def mm(a, w_ref):                     # MXU matmul, f32 accumulation
        w = w_ref[...]
        return jnp.dot(a.astype(w.dtype), w, preferred_element_type=f32)

    # ---- encoder ----
    h = _selu(mm(x_ref[...], w1_ref) + bias_ref[0:1, 0:half_p])
    h = _selu(mm(h, w2_ref) + bias_ref[1:2, 0:hid_p])

    # ---- fused mu|logvar head (f32 weights for KL / exp precision),
    #      single lane-dense store ----
    mulv = mm(h, wmulv_ref) + bias_ref[2:3, 0:2 * lat_p]
    mulv_ref[...] = mulv
    mu = mulv[:, 0:lat_p]
    logvar = mulv[:, lat_p:2 * lat_p]

    # ---- reparameterise (training mode): z = eps * exp(0.5*logvar) + mu ----
    # element-wise math kept in f32 (v5e VPU/EUP have no bf16 path)
    z = eps_ref[...] * jnp.exp(0.5 * logvar) + mu

    # ---- decoder trunk ----
    d = _selu(mm(z, wd1_ref) + bias_ref[3:4, 0:hid_p])
    d = _selu(mm(d, wd2_ref) + bias_ref[4:5, 0:hid_p])

    # ---- fused wide decoder head: one MXU launch over [ws1 | w_v|w_j].
    #      cols [0:HLF)        -> pre-activation of decoder_sequence[0]
    #      cols [HLF:HLF+DOUT) -> v/j contribution to x_hat
    head = mm(d, wdh_ref) + bias_ref[5:6, 0:half_p + dout_p]
    s = _selu(head[:, 0:half_p])
    xhat = (mm(s, ws2_ref)
            + head[:, half_p:half_p + dout_p]
            + bias_ref[6:7, 0:dout_p])
    xhat_ref[...] = xhat.astype(xhat_ref.dtype)     # one unmasked store


# ---------------------------------------------------------------------------
# Parameter construction / packing
# ---------------------------------------------------------------------------
def make_linear_params(key, fan_in, fan_out):
    """Deterministic PyTorch-Linear-like init: U(-1/sqrt(fan_in), 1/sqrt(fan_in))."""
    kw, kb = jax.random.split(key)
    bound = 1.0 / np.sqrt(fan_in)
    w = jax.random.uniform(kw, (fan_in, fan_out), jnp.float32, -bound, bound)
    b = jax.random.uniform(kb, (1, fan_out), jnp.float32, -bound, bound)
    return w, b


def build_params(key, input_dim, hidden_dim, latent_dim, v_dim, j_dim):
    half = input_dim // 2
    seq_out = input_dim - v_dim - j_dim
    keys = jax.random.split(key, 10)
    params = []
    params += make_linear_params(keys[0], input_dim, half)         # encoder[0]
    params += make_linear_params(keys[1], half, hidden_dim)        # encoder[2]
    params += make_linear_params(keys[2], hidden_dim, latent_dim)  # encoder_mu
    params += make_linear_params(keys[3], hidden_dim, latent_dim)  # encoder_logvar
    params += make_linear_params(keys[4], latent_dim, hidden_dim)  # decoder[0]
    params += make_linear_params(keys[5], hidden_dim, hidden_dim)  # decoder[2]
    params += make_linear_params(keys[6], hidden_dim, half)        # decoder_sequence[0]
    params += make_linear_params(keys[7], half, seq_out)           # decoder_sequence[2]
    params += make_linear_params(keys[8], hidden_dim, v_dim)       # decoder_v
    params += make_linear_params(keys[9], hidden_dim, j_dim)       # decoder_j
    return params


def pack_params(params, *, input_dim, hidden_dim, latent_dim, v_dim, j_dim,
                matmul_dtype=jnp.bfloat16):
    """Zero-pad feature dims to lane multiples, fuse heads, pack biases."""
    (w_e1, b_e1, w_e2, b_e2, w_mu, b_mu, w_lv, b_lv,
     w_d1, b_d1, w_d2, b_d2, w_s1, b_s1, w_s2, b_s2,
     w_v, b_v, w_j, b_j) = params
    half = input_dim // 2
    seq_dim = input_dim - v_dim - j_dim
    DIN = _round_up(input_dim, _LANE)
    HLF = _round_up(half, _LANE)
    HID = _round_up(hidden_dim, _LANE)
    LAT = _round_up(latent_dim, _LANE)
    DOUT = _round_up(input_dim, _LANE)
    MAXW = max(HLF, HID, 2 * LAT, HLF + DOUT)

    def pad_w(w, rows, cols):
        return jnp.zeros((rows, cols), jnp.float32).at[:w.shape[0], :w.shape[1]].set(w)

    w1 = pad_w(w_e1, DIN, HLF)
    w2 = pad_w(w_e2, HLF, HID)
    wmulv = jnp.zeros((HID, 2 * LAT), jnp.float32)
    wmulv = wmulv.at[:hidden_dim, :latent_dim].set(w_mu)
    wmulv = wmulv.at[:hidden_dim, LAT:LAT + latent_dim].set(w_lv)
    wd1 = pad_w(w_d1, LAT, HID)
    wd2 = pad_w(w_d2, HID, HID)
    # fused wide head consuming d: cols [0:HLF) = ws1, cols [HLF+seq..] = w_v|w_j
    wdh = jnp.zeros((HID, HLF + DOUT), jnp.float32)
    wdh = wdh.at[:hidden_dim, :half].set(w_s1)
    wdh = wdh.at[:hidden_dim, HLF + seq_dim:HLF + seq_dim + v_dim].set(w_v)
    wdh = wdh.at[:hidden_dim,
                 HLF + seq_dim + v_dim:HLF + seq_dim + v_dim + j_dim].set(w_j)
    # sequence output weight (consumes SELU(s_pre))
    ws2 = jnp.zeros((HLF, DOUT), jnp.float32)
    ws2 = ws2.at[:half, :seq_dim].set(w_s2)

    bias = jnp.zeros((8, MAXW), jnp.float32)
    bias = bias.at[0, :half].set(b_e1.reshape(-1))
    bias = bias.at[1, :hidden_dim].set(b_e2.reshape(-1))
    bias = bias.at[2, :latent_dim].set(b_mu.reshape(-1))
    bias = bias.at[2, LAT:LAT + latent_dim].set(b_lv.reshape(-1))
    bias = bias.at[3, :hidden_dim].set(b_d1.reshape(-1))
    bias = bias.at[4, :hidden_dim].set(b_d2.reshape(-1))
    bias = bias.at[5, :half].set(b_s1.reshape(-1))            # fused-head bias (s_pre part)
    bias = bias.at[6, :seq_dim].set(b_s2.reshape(-1))
    bias = bias.at[6, seq_dim:seq_dim + v_dim].set(b_v.reshape(-1))
    bias = bias.at[6, seq_dim + v_dim:seq_dim + v_dim + j_dim].set(b_j.reshape(-1))

    # mu/logvar head stays f32 (feeds exp / KL); the rest goes to matmul dtype
    weights = (w1.astype(matmul_dtype), w2.astype(matmul_dtype),
               wmulv.astype(jnp.float32),
               wd1.astype(matmul_dtype), wd2.astype(matmul_dtype),
               wdh.astype(matmul_dtype), ws2.astype(matmul_dtype))
    dims = dict(DIN=DIN, HLF=HLF, HID=HID, LAT=LAT, DOUT=DOUT, MAXW=MAXW)
    return weights, bias, dims


# ---------------------------------------------------------------------------
# Wrapper
# ---------------------------------------------------------------------------
def _default_block_b():
    # 512 on v5-class (16 MiB default scoped VMEM), 1024 on v6e/v7x.
    try:
        kind = jax.devices()[0].device_kind.lower()
    except Exception:
        return 512
    return 512 if "v5" in kind else 1024


def cdr3b_vae_forward(x, eps, weights, bias, dims, *,
                      input_dim, latent_dim, block_b=None):
    B = x.shape[0]
    DIN, HLF, HID = dims["DIN"], dims["HLF"], dims["HID"]
    LAT, DOUT = dims["LAT"], dims["DOUT"]
    mdt = weights[0].dtype                 # matmul / x / x_hat I/O dtype
    if block_b is None:
        block_b = _default_block_b()

    # --- batch tiling: big tiles for HBM bandwidth; >=2 even grid steps once
    #     the batch is large enough (both v7x TensorCores busy, balanced);
    #     tile derived from step count so over-padding stays small ----------
    B_sub = _round_up(B, _SUB)
    n_steps = _cdiv(B_sub, block_b)
    if B_sub >= 2 * _SUB:
        n_steps = max(n_steps, 2)
    if n_steps > 1 and n_steps % 2:
        n_steps += 1
    TB = _round_up(_cdiv(B_sub, n_steps), _SUB)
    B_pad = TB * n_steps

    # x / x_hat are the widest HBM streams -> carry them in the matmul dtype.
    x_p = jnp.zeros((B_pad, DIN), mdt).at[:B, :input_dim].set(x.astype(mdt))
    eps_p = jnp.zeros((B_pad, LAT), jnp.float32).at[:B, :latent_dim].set(eps)

    kernel = functools.partial(_vae_kernel, HLF, HID, LAT, DOUT)

    def resident(shape):
        # constant index_map -> stays in VMEM across steps; single buffer
        return pl.BlockSpec(shape, lambda i: (0, 0),
                            pipeline_mode=pl.Buffered(1))

    itemsize = jnp.dtype(mdt).itemsize
    wbytes = sum(int(np.prod(w.shape)) * w.dtype.itemsize for w in weights)
    wbytes += int(bias.size) * 4
    io_block = TB * (DIN * itemsize + LAT * 4 + DOUT * itemsize + 2 * LAT * 4)
    interm = TB * (HLF + 3 * HID + 4 * LAT + 2 * (HLF + DOUT) + DOUT) * 4
    vmem_limit = int(min(64 * 2**20,
                         max(32 * 2**20, 2 * io_block + wbytes + interm)))

    flops_row = 2 * (DIN * HLF + HLF * HID + HID * 2 * LAT + LAT * HID
                     + HID * HID + HID * (HLF + DOUT) + HLF * DOUT)
    transc_row = 2 * HLF + 3 * HID + LAT
    cost = pl.CostEstimate(
        flops=int(flops_row * B_pad),
        transcendentals=int(transc_row * B_pad),
        bytes_accessed=int(wbytes + B_pad * (DIN * itemsize + LAT * 4
                                             + DOUT * itemsize + 2 * LAT * 4)),
    )

    xhat_p, mulv_p = pl.pallas_call(
        kernel,
        grid=(n_steps,),
        in_specs=[
            pl.BlockSpec((TB, DIN), lambda i: (i, 0)),      # x block
            pl.BlockSpec((TB, LAT), lambda i: (i, 0)),      # eps block
            resident(weights[0].shape), resident(weights[1].shape),
            resident(weights[2].shape), resident(weights[3].shape),
            resident(weights[4].shape), resident(weights[5].shape),
            resident(weights[6].shape), resident(bias.shape),
        ],
        out_specs=(
            pl.BlockSpec((TB, DOUT), lambda i: (i, 0)),     # x_hat (padded)
            pl.BlockSpec((TB, 2 * LAT), lambda i: (i, 0)),  # mu|logvar (padded)
        ),
        out_shape=(
            jax.ShapeDtypeStruct((B_pad, DOUT), mdt),
            jax.ShapeDtypeStruct((B_pad, 2 * LAT), jnp.float32),
        ),
        compiler_params=pltpu.CompilerParams(
            dimension_semantics=("parallel",),              # megacore on v7x
            vmem_limit_bytes=vmem_limit),
        cost_estimate=cost,
    )(x_p, eps_p, *weights, bias)

    x_hat = xhat_p[:B, :input_dim].astype(jnp.float32)
    mu = mulv_p[:B, :latent_dim]
    logvar = mulv_p[:B, LAT:LAT + latent_dim]
    return x_hat, mu, logvar


# ---------------------------------------------------------------------------
# Plain-JAX reference (for validation)
# ---------------------------------------------------------------------------
def reference_forward(x, eps, params):
    (w_e1, b_e1, w_e2, b_e2, w_mu, b_mu, w_lv, b_lv,
     w_d1, b_d1, w_d2, b_d2, w_s1, b_s1, w_s2, b_s2,
     w_v, b_v, w_j, b_j) = params
    h = _selu(x @ w_e1 + b_e1)
    h = _selu(h @ w_e2 + b_e2)
    mu = h @ w_mu + b_mu
    logvar = h @ w_lv + b_lv
    z = eps * jnp.exp(0.5 * logvar) + mu
    d = _selu(z @ w_d1 + b_d1)
    d = _selu(d @ w_d2 + b_d2)
    s = _selu(d @ w_s1 + b_s1) @ w_s2 + b_s2
    v = d @ w_v + b_v
    j = d @ w_j + b_j
    x_hat = jnp.concatenate([s, v, j], axis=1)
    return x_hat, mu, logvar


if __name__ == "__main__":
    # Small shapes consistent with the module's constructor conventions.
    max_len = 8        # (module default 23)
    aa_dim = 20
    v_dim = 12         # (module default 51)
    j_dim = 8          # (module default 13)
    hidden_dim = 32    # (module default 128)
    latent_dim = 16    # (module default 32)
    input_dim = max_len * aa_dim + v_dim + j_dim  # 180
    B = 4

    root = jax.random.PRNGKey(0)
    k_x, k_eps, k_params, k_x2, k_eps2 = jax.random.split(root, 5)

    # x is the already-encoded flat input: [seq (max_len*aa_dim) | v one-hot | j one-hot]
    x = jax.random.normal(k_x, (B, input_dim), jnp.float32)
    # reparameterisation noise (module is in training mode by default);
    # drawn once here so the forward is deterministic.
    eps = jax.random.normal(k_eps, (B, latent_dim), jnp.float32)

    params = build_params(k_params, input_dim, hidden_dim, latent_dim, v_dim, j_dim)
    x_hat_r, mu_r, logvar_r = reference_forward(x, eps, params)

    # --- f32-matmul path: tight check against the plain-JAX reference -------
    w_f32, b_pack, dims = pack_params(
        params, input_dim=input_dim, hidden_dim=hidden_dim,
        latent_dim=latent_dim, v_dim=v_dim, j_dim=j_dim,
        matmul_dtype=jnp.float32)
    x_hat, mu, logvar = cdr3b_vae_forward(
        x, eps, w_f32, b_pack, dims, input_dim=input_dim, latent_dim=latent_dim)
    jax.block_until_ready((x_hat, mu, logvar))
    np.testing.assert_allclose(np.asarray(mu), np.asarray(mu_r), rtol=1e-4, atol=1e-5)
    np.testing.assert_allclose(np.asarray(logvar), np.asarray(logvar_r), rtol=1e-4, atol=1e-5)
    np.testing.assert_allclose(np.asarray(x_hat), np.asarray(x_hat_r), rtol=1e-4, atol=1e-4)

    # --- bf16 I/O + bf16 matmul path (v6e/v7x peak), mu/logvar head in f32 ---
    w_bf16, b_pack2, dims2 = pack_params(
        params, input_dim=input_dim, hidden_dim=hidden_dim,
        latent_dim=latent_dim, v_dim=v_dim, j_dim=j_dim,
        matmul_dtype=jnp.bfloat16)
    x_hat_b, mu_b, logvar_b = cdr3b_vae_forward(
        x, eps, w_bf16, b_pack2, dims2, input_dim=input_dim, latent_dim=latent_dim)
    jax.block_until_ready((x_hat_b, mu_b, logvar_b))
    np.testing.assert_allclose(np.asarray(mu_b), np.asarray(mu_r), rtol=5e-2, atol=5e-2)
    np.testing.assert_allclose(np.asarray(logvar_b), np.asarray(logvar_r), rtol=5e-2, atol=5e-2)
    np.testing.assert_allclose(np.asarray(x_hat_b), np.asarray(x_hat_r), rtol=1e-1, atol=1e-1)

    # --- awkward larger batch: exercises the >=2-step even grid (megacore),
    #     tile-from-step-count padding logic, and bf16 activation I/O ---------
    B2 = 40
    x2 = jax.random.normal(k_x2, (B2, input_dim), jnp.float32)
    eps2 = jax.random.normal(k_eps2, (B2, latent_dim), jnp.float32)
    x_hat_r2, mu_r2, logvar_r2 = reference_forward(x2, eps2, params)
    x_hat2, mu2, logvar2 = cdr3b_vae_forward(
        x2, eps2, w_bf16, b_pack2, dims2, input_dim=input_dim, latent_dim=latent_dim)
    jax.block_until_ready((x_hat2, mu2, logvar2))
    np.testing.assert_allclose(np.asarray(mu2), np.asarray(mu_r2), rtol=5e-2, atol=5e-2)
    np.testing.assert_allclose(np.asarray(logvar2), np.asarray(logvar_r2), rtol=5e-2, atol=5e-2)
    np.testing.assert_allclose(np.asarray(x_hat2), np.asarray(x_hat_r2), rtol=1e-1, atol=1e-1)

    # TODO(synk): recover_indices / recover_sequences_blosum (BLOSUM argmin decode)
    # are post-hoc utilities outside forward() and are not implemented here.
    print("KERNEL_OK")
</pallas_src>

<mosaic_0001>
module attributes {stable_mosaic.version = 11 : i64} {
  func.func @_vae_kernel(%arg0: i32, %arg1: memref<16x256xf32, #tpu.memory_space<vmem>>, %arg2: memref<16x128xf32, #tpu.memory_space<vmem>>, %arg3: memref<256x128xf32, #tpu.memory_space<vmem>>, %arg4: memref<128x128xf32, #tpu.memory_space<vmem>>, %arg5: memref<128x256xf32, #tpu.memory_space<vmem>>, %arg6: memref<128x128xf32, #tpu.memory_space<vmem>>, %arg7: memref<128x128xf32, #tpu.memory_space<vmem>>, %arg8: memref<128x384xf32, #tpu.memory_space<vmem>>, %arg9: memref<128x256xf32, #tpu.memory_space<vmem>>, %arg10: memref<8x384xf32, #tpu.memory_space<vmem>>, %arg11: memref<16x256xf32, #tpu.memory_space<vmem>>, %arg12: memref<16x256xf32, #tpu.memory_space<vmem>>) attributes {dimension_semantics = [#tpu.dimension_semantics<parallel>], iteration_bounds = array<i64: 1>, scalar_prefetch = 0 : i64, scratch_operands = 0 : i64, tpu.core_type = #tpu.core_type<tc>, window_params = [{transform_indices = @transform_0, window_bounds = array<i64: 16, 256>}, {transform_indices = @transform_1, window_bounds = array<i64: 16, 128>}, {pipeline_mode = #tpu.pipeline_mode<synchronous>, transform_indices = @transform_2, window_bounds = array<i64: 256, 128>}, {pipeline_mode = #tpu.pipeline_mode<synchronous>, transform_indices = @transform_3, window_bounds = array<i64: 128, 128>}, {pipeline_mode = #tpu.pipeline_mode<synchronous>, transform_indices = @transform_4, window_bounds = array<i64: 128, 256>}, {pipeline_mode = #tpu.pipeline_mode<synchronous>, transform_indices = @transform_5, window_bounds = array<i64: 128, 128>}, {pipeline_mode = #tpu.pipeline_mode<synchronous>, transform_indices = @transform_6, window_bounds = array<i64: 128, 128>}, {pipeline_mode = #tpu.pipeline_mode<synchronous>, transform_indices = @transform_7, window_bounds = array<i64: 128, 384>}, {pipeline_mode = #tpu.pipeline_mode<synchronous>, transform_indices = @transform_8, window_bounds = array<i64: 128, 256>}, {pipeline_mode = #tpu.pipeline_mode<synchronous>, transform_indices = @transform_9, window_bounds = array<i64: 8, 384>}, {transform_indices = @transform_10, window_bounds = array<i64: 16, 256>}, {transform_indices = @transform_11, window_bounds = array<i64: 16, 256>}]} {
    %c0 = arith.constant 0 : index
    %c0_0 = arith.constant 0 : index
    %0 = vector.load %arg1[%c0, %c0_0] : memref<16x256xf32, #tpu.memory_space<vmem>>, vector<16x256xf32>
    %c0_1 = arith.constant 0 : index
    %c0_2 = arith.constant 0 : index
    %1 = vector.load %arg3[%c0_1, %c0_2] : memref<256x128xf32, #tpu.memory_space<vmem>>, vector<256x128xf32>
    %cst = arith.constant dense<0.000000e+00> : vector<16x128xf32>
    %2 = tpu.matmul %0, %1, %cst {dimension_numbers = #tpu.dot_dimension_numbers<[1], [0], [0], [1], [0, 0, 1, 1], [], []>} : vector<16x256xf32>, vector<256x128xf32>, vector<16x128xf32> -> vector<16x128xf32>
    %c0_3 = arith.constant 0 : index
    %c0_4 = arith.constant 0 : index
    %3 = vector.load %arg10[%c0_3, %c0_4] : memref<8x384xf32, #tpu.memory_space<vmem>>, vector<1x128xf32>
    %4 = vector.broadcast %3 : vector<1x128xf32> to vector<16x128xf32>
    %5 = arith.addf %2, %4 : vector<16x128xf32>
    %cst_5 = arith.constant 0.000000e+00 : f32
    %6 = vector.broadcast %cst_5 : f32 to vector<16x128xf32>
    %7 = arith.minimumf %5, %6 : vector<16x128xf32>
    %8 = math.exp %7 : vector<16x128xf32>
    %cst_6 = arith.constant 1.000000e+00 : f32
    %9 = vector.broadcast %cst_6 : f32 to vector<16x128xf32>
    %10 = arith.subf %8, %9 : vector<16x128xf32>
    %cst_7 = arith.constant 1.67326319 : f32
    %11 = vector.broadcast %cst_7 : f32 to vector<16x128xf32>
    %12 = arith.mulf %11, %10 : vector<16x128xf32>
    %cst_8 = arith.constant 0.000000e+00 : f32
    %13 = vector.broadcast %cst_8 : f32 to vector<16x128xf32>
    %14 = arith.cmpf ogt, %5, %13 : vector<16x128xf32>
    %15 = arith.select %14, %5, %12 : vector<16x128xi1>, vector<16x128xf32>
    %cst_9 = arith.constant 1.05070102 : f32
    %16 = vector.broadcast %cst_9 : f32 to vector<16x128xf32>
    %17 = arith.mulf %16, %15 : vector<16x128xf32>
    %c0_10 = arith.constant 0 : index
    %c0_11 = arith.constant 0 : index
    %18 = vector.load %arg4[%c0_10, %c0_11] : memref<128x128xf32, #tpu.memory_space<vmem>>, vector<128x128xf32>
    %cst_12 = arith.constant dense<0.000000e+00> : vector<16x128xf32>
    %19 = tpu.matmul %17, %18, %cst_12 {dimension_numbers = #tpu.dot_dimension_numbers<[1], [0], [0], [1], [0, 0, 1, 1], [], []>} : vector<16x128xf32>, vector<128x128xf32>, vector<16x128xf32> -> vector<16x128xf32>
    %c1 = arith.constant 1 : index
    %c0_13 = arith.constant 0 : index
    %20 = vector.load %arg10[%c1, %c0_13] : memref<8x384xf32, #tpu.memory_space<vmem>>, vector<1x128xf32>
    %21 = vector.broadcast %20 : vector<1x128xf32> to vector<16x128xf32>
    %22 = arith.addf %19, %21 : vector<16x128xf32>
    %cst_14 = arith.constant 0.000000e+00 : f32
    %23 = vector.broadcast %cst_14 : f32 to vector<16x128xf32>
    %24 = arith.minimumf %22, %23 : vector<16x128xf32>
    %25 = math.exp %24 : vector<16x128xf32>
    %cst_15 = arith.constant 1.000000e+00 : f32
    %26 = vector.broadcast %cst_15 : f32 to vector<16x128xf32>
    %27 = arith.subf %25, %26 : vector<16x128xf32>
    %cst_16 = arith.constant 1.67326319 : f32
    %28 = vector.broadcast %cst_16 : f32 to vector<16x128xf32>
    %29 = arith.mulf %28, %27 : vector<16x128xf32>
    %cst_17 = arith.constant 0.000000e+00 : f32
    %30 = vector.broadcast %cst_17 : f32 to vector<16x128xf32>
    %31 = arith.cmpf ogt, %22, %30 : vector<16x128xf32>
    %32 = arith.select %31, %22, %29 : vector<16x128xi1>, vector<16x128xf32>
    %cst_18 = arith.constant 1.05070102 : f32
    %33 = vector.broadcast %cst_18 : f32 to vector<16x128xf32>
    %34 = arith.mulf %33, %32 : vector<16x128xf32>
    %c0_19 = arith.constant 0 : index
    %c0_20 = arith.constant 0 : index
    %35 = vector.load %arg5[%c0_19, %c0_20] : memref<128x256xf32, #tpu.memory_space<vmem>>, vector<128x256xf32>
    %cst_21 = arith.constant dense<0.000000e+00> : vector<16x256xf32>
    %36 = tpu.matmul %34, %35, %cst_21 {dimension_numbers = #tpu.dot_dimension_numbers<[1], [0], [0], [1], [0, 0, 1, 1], [], []>} : vector<16x128xf32>, vector<128x256xf32>, vector<16x256xf32> -> vector<16x256xf32>
    %c2 = arith.constant 2 : index
    %c0_22 = arith.constant 0 : index
    %37 = vector.load %arg10[%c2, %c0_22] : memref<8x384xf32, #tpu.memory_space<vmem>>, vector<1x256xf32>
    %38 = vector.broadcast %37 : vector<1x256xf32> to vector<16x256xf32>
    %39 = arith.addf %36, %38 : vector<16x256xf32>
    %c0_23 = arith.constant 0 : index
    %c0_24 = arith.constant 0 : index
    %40 = vector.load %arg12[%c0_23, %c0_24] : memref<16x256xf32, #tpu.memory_space<vmem>>, vector<16x256xf32>
    tpu.vector_store %arg12[%c0_23, %c0_24], %39 {strides = array<i32>} : memref<16x256xf32, #tpu.memory_space<vmem>>, vector<16x256xf32>,
    %41 = vector.extract_strided_slice %39 {offsets = [0, 0], sizes = [16, 128], strides = [1, 1]} : vector<16x256xf32> to vector<16x128xf32>
    %42 = vector.extract_strided_slice %39 {offsets = [0, 128], sizes = [16, 128], strides = [1, 1]} : vector<16x256xf32> to vector<16x128xf32>
    %c0_25 = arith.constant 0 : index
    %c0_26 = arith.constant 0 : index
    %43 = vector.load %arg2[%c0_25, %c0_26] : memref<16x128xf32, #tpu.memory_space<vmem>>, vector<16x128xf32>
    %cst_27 = arith.constant 5.000000e-01 : f32
    %44 = vector.broadcast %cst_27 : f32 to vector<16x128xf32>
    %45 = arith.mulf %44, %42 : vector<16x128xf32>
    %46 = math.exp %45 : vector<16x128xf32>
    %47 = arith.mulf %43, %46 : vector<16x128xf32>
    %48 = arith.addf %47, %41 : vector<16x128xf32>
    %c0_28 = arith.constant 0 : index
    %c0_29 = arith.constant 0 : index
    %49 = vector.load %arg6[%c0_28, %c0_29] : memref<128x128xf32, #tpu.memory_space<vmem>>, vector<128x128xf32>
    %cst_30 = arith.constant dense<0.000000e+00> : vector<16x128xf32>
    %50 = tpu.matmul %48, %49, %cst_30 {dimension_numbers = #tpu.dot_dimension_numbers<[1], [0], [0], [1], [0, 0, 1, 1], [], []>} : vector<16x128xf32>, vector<128x128xf32>, vector<16x128xf32> -> vector<16x128xf32>
    %c3 = arith.constant 3 : index
    %c0_31 = arith.constant 0 : index
    %51 = vector.load %arg10[%c3, %c0_31] : memref<8x384xf32, #tpu.memory_space<vmem>>, vector<1x128xf32>
    %52 = vector.broadcast %51 : vector<1x128xf32> to vector<16x128xf32>
    %53 = arith.addf %50, %52 : vector<16x128xf32>
    %cst_32 = arith.constant 0.000000e+00 : f32
    %54 = vector.broadcast %cst_32 : f32 to vector<16x128xf32>
    %55 = arith.minimumf %53, %54 : vector<16x128xf32>
    %56 = math.exp %55 : vector<16x128xf32>
    %cst_33 = arith.constant 1.000000e+00 : f32
    %57 = vector.broadcast %cst_33 : f32 to vector<16x128xf32>
    %58 = arith.subf %56, %57 : vector<16x128xf32>
    %cst_34 = arith.constant 1.67326319 : f32
    %59 = vector.broadcast %cst_34 : f32 to vector<16x128xf32>
    %60 = arith.mulf %59, %58 : vector<16x128xf32>
    %cst_35 = arith.constant 0.000000e+00 : f32
    %61 = vector.broadcast %cst_35 : f32 to vector<16x128xf32>
    %62 = arith.cmpf ogt, %53, %61 : vector<16x128xf32>
    %63 = arith.select %62, %53, %60 : vector<16x128xi1>, vector<16x128xf32>
    %cst_36 = arith.constant 1.05070102 : f32
    %64 = vector.broadcast %cst_36 : f32 to vector<16x128xf32>
    %65 = arith.mulf %64, %63 : vector<16x128xf32>
    %c0_37 = arith.constant 0 : index
    %c0_38 = arith.constant 0 : index
    %66 = vector.load %arg7[%c0_37, %c0_38] : memref<128x128xf32, #tpu.memory_space<vmem>>, vector<128x128xf32>
    %cst_39 = arith.constant dense<0.000000e+00> : vector<16x128xf32>
    %67 = tpu.matmul %65, %66, %cst_39 {dimension_numbers = #tpu.dot_dimension_numbers<[1], [0], [0], [1], [0, 0, 1, 1], [], []>} : vector<16x128xf32>, vector<128x128xf32>, vector<16x128xf32> -> vector<16x128xf32>
    %c4 = arith.constant 4 : index
    %c0_40 = arith.constant 0 : index
    %68 = vector.load %arg10[%c4, %c0_40] : memref<8x384xf32, #tpu.memory_space<vmem>>, vector<1x128xf32>
    %69 = vector.broadcast %68 : vector<1x128xf32> to vector<16x128xf32>
    %70 = arith.addf %67, %69 : vector<16x128xf32>
    %cst_41 = arith.constant 0.000000e+00 : f32
    %71 = vector.broadcast %cst_41 : f32 to vector<16x128xf32>
    %72 = arith.minimumf %70, %71 : vector<16x128xf32>
    %73 = math.exp %72 : vector<16x128xf32>
    %cst_42 = arith.constant 1.000000e+00 : f32
    %74 = vector.broadcast %cst_42 : f32 to vector<16x128xf32>
    %75 = arith.subf %73, %74 : vector<16x128xf32>
    %cst_43 = arith.constant 1.67326319 : f32
    %76 = vector.broadcast %cst_43 : f32 to vector<16x128xf32>
    %77 = arith.mulf %76, %75 : vector<16x128xf32>
    %cst_44 = arith.constant 0.000000e+00 : f32
    %78 = vector.broadcast %cst_44 : f32 to vector<16x128xf32>
    %79 = arith.cmpf ogt, %70, %78 : vector<16x128xf32>
    %80 = arith.select %79, %70, %77 : vector<16x128xi1>, vector<16x128xf32>
    %cst_45 = arith.constant 1.05070102 : f32
    %81 = vector.broadcast %cst_45 : f32 to vector<16x128xf32>
    %82 = arith.mulf %81, %80 : vector<16x128xf32>
    %c0_46 = arith.constant 0 : index
    %c0_47 = arith.constant 0 : index
    %83 = vector.load %arg8[%c0_46, %c0_47] : memref<128x384xf32, #tpu.memory_space<vmem>>, vector<128x384xf32>
    %cst_48 = arith.constant dense<0.000000e+00> : vector<16x384xf32>
    %84 = tpu.matmul %82, %83, %cst_48 {dimension_numbers = #tpu.dot_dimension_numbers<[1], [0], [0], [1], [0, 0, 1, 1], [], []>} : vector<16x128xf32>, vector<128x384xf32>, vector<16x384xf32> -> vector<16x384xf32>
    %c5 = arith.constant 5 : index
    %c0_49 = arith.constant 0 : index
    %85 = vector.load %arg10[%c5, %c0_49] : memref<8x384xf32, #tpu.memory_space<vmem>>, vector<1x384xf32>
    %86 = vector.broadcast %85 : vector<1x384xf32> to vector<16x384xf32>
    %87 = arith.addf %84, %86 : vector<16x384xf32>
    %88 = vector.extract_strided_slice %87 {offsets = [0, 0], sizes = [16, 128], strides = [1, 1]} : vector<16x384xf32> to vector<16x128xf32>
    %cst_50 = arith.constant 0.000000e+00 : f32
    %89 = vector.broadcast %cst_50 : f32 to vector<16x128xf32>
    %90 = arith.minimumf %88, %89 : vector<16x128xf32>
    %91 = math.exp %90 : vector<16x128xf32>
    %cst_51 = arith.constant 1.000000e+00 : f32
    %92 = vector.broadcast %cst_51 : f32 to vector<16x128xf32>
    %93 = arith.subf %91, %92 : vector<16x128xf32>
    %cst_52 = arith.constant 1.67326319 : f32
    %94 = vector.broadcast %cst_52 : f32 to vector<16x128xf32>
    %95 = arith.mulf %94, %93 : vector<16x128xf32>
    %cst_53 = arith.constant 0.000000e+00 : f32
    %96 = vector.broadcast %cst_53 : f32 to vector<16x128xf32>
    %97 = arith.cmpf ogt, %88, %96 : vector<16x128xf32>
    %98 = arith.select %97, %88, %95 : vector<16x128xi1>, vector<16x128xf32>
    %cst_54 = arith.constant 1.05070102 : f32
    %99 = vector.broadcast %cst_54 : f32 to vector<16x128xf32>
    %100 = arith.mulf %99, %98 : vector<16x128xf32>
    %c0_55 = arith.constant 0 : index
    %c0_56 = arith.constant 0 : index
    %101 = vector.load %arg9[%c0_55, %c0_56] : memref<128x256xf32, #tpu.memory_space<vmem>>, vector<128x256xf32>
    %cst_57 = arith.constant dense<0.000000e+00> : vector<16x256xf32>
    %102 = tpu.matmul %100, %101, %cst_57 {dimension_numbers = #tpu.dot_dimension_numbers<[1], [0], [0], [1], [0, 0, 1, 1], [], []>} : vector<16x128xf32>, vector<128x256xf32>, vector<16x256xf32> -> vector<16x256xf32>
    %103 = vector.extract_strided_slice %87 {offsets = [0, 128], sizes = [16, 256], strides = [1, 1]} : vector<16x384xf32> to vector<16x256xf32>
    %104 = arith.addf %102, %103 : vector<16x256xf32>
    %c6 = arith.constant 6 : index
    %c0_58 = arith.constant 0 : index
    %105 = vector.load %arg10[%c6, %c0_58] : memref<8x384xf32, #tpu.memory_space<vmem>>, vector<1x256xf32>
    %106 = vector.broadcast %105 : vector<1x256xf32> to vector<16x256xf32>
    %107 = arith.addf %104, %106 : vector<16x256xf32>
    %c0_59 = arith.constant 0 : index
    %c0_60 = arith.constant 0 : index
    %108 = vector.load %arg11[%c0_59, %c0_60] : memref<16x256xf32, #tpu.memory_space<vmem>>, vector<16x256xf32>
    tpu.vector_store %arg11[%c0_59, %c0_60], %107 {strides = array<i32>} : memref<16x256xf32, #tpu.memory_space<vmem>>, vector<16x256xf32>,
    return
  }
  func.func @transform_0(%arg0: i32) -> (i32, i32) {
    %c0_i32 = arith.constant 0 : i32
    %c0_i32_0 = arith.constant 0 : i32
    return %arg0, %c0_i32 : i32, i32
  }
  func.func @transform_1(%arg0: i32) -> (i32, i32) {
    %c0_i32 = arith.constant 0 : i32
    %c0_i32_0 = arith.constant 0 : i32
    return %arg0, %c0_i32 : i32, i32
  }
  func.func @transform_2(%arg0: i32) -> (i32, i32) {
    %c0_i32 = arith.constant 0 : i32
    %c0_i32_0 = arith.constant 0 : i32
    %c0_i32_1 = arith.constant 0 : i32
    return %c0_i32, %c0_i32_0 : i32, i32
  }
  func.func @transform_3(%arg0: i32) -> (i32, i32) {
    %c0_i32 = arith.constant 0 : i32
    %c0_i32_0 = arith.constant 0 : i32
    %c0_i32_1 = arith.constant 0 : i32
    return %c0_i32, %c0_i32_0 : i32, i32
  }
  func.func @transform_4(%arg0: i32) -> (i32, i32) {
    %c0_i32 = arith.constant 0 : i32
    %c0_i32_0 = arith.constant 0 : i32
    %c0_i32_1 = arith.constant 0 : i32
    return %c0_i32, %c0_i32_0 : i32, i32
  }
  func.func @transform_5(%arg0: i32) -> (i32, i32) {
    %c0_i32 = arith.constant 0 : i32
    %c0_i32_0 = arith.constant 0 : i32
    %c0_i32_1 = arith.constant 0 : i32
    return %c0_i32, %c0_i32_0 : i32, i32
  }
  func.func @transform_6(%arg0: i32) -> (i32, i32) {
    %c0_i32 = arith.constant 0 : i32
    %c0_i32_0 = arith.constant 0 : i32
    %c0_i32_1 = arith.constant 0 : i32
    return %c0_i32, %c0_i32_0 : i32, i32
  }
  func.func @transform_7(%arg0: i32) -> (i32, i32) {
    %c0_i32 = arith.constant 0 : i32
    %c0_i32_0 = arith.constant 0 : i32
    %c0_i32_1 = arith.constant 0 : i32
    return %c0_i32, %c0_i32_0 : i32, i32
  }
  func.func @transform_8(%arg0: i32) -> (i32, i32) {
    %c0_i32 = arith.constant 0 : i32
    %c0_i32_0 = arith.constant 0 : i32
    %c0_i32_1 = arith.constant 0 : i32
    return %c0_i32, %c0_i32_0 : i32, i32
  }
  func.func @transform_9(%arg0: i32) -> (i32, i32) {
    %c0_i32 = arith.constant 0 : i32
    %c0_i32_0 = arith.constant 0 : i32
    %c0_i32_1 = arith.constant 0 : i32
    return %c0_i32, %c0_i32_0 : i32, i32
  }
  func.func @transform_10(%arg0: i32) -> (i32, i32) {
    %c0_i32 = arith.constant 0 : i32
    %c0_i32_0 = arith.constant 0 : i32
    return %arg0, %c0_i32 : i32, i32
  }
  func.func @transform_11(%arg0: i32) -> (i32, i32) {
    %c0_i32 = arith.constant 0 : i32
    %c0_i32_0 = arith.constant 0 : i32
    return %arg0, %c0_i32 : i32, i32
  }
}

</mosaic_0001>

<llo_original>
// kernel: tpu_custom_call.1
$region0: #{tpu_custom_call.1}
  #allocation0 [shape = 'u32[]', space=smem, size = 0x4, offset = 0x4, fixed_abs, tag = 'smem constant byte address 0x4 - core index']
  #allocation1 [shape = 'u32[144,128]{1,0:T(1,128)}', space=vmem, size = 0x12000, scoped, tag = 'internal scratch']
  %s0 = inlined_call_operand.hbm [shape: f32[16,256], index: 0, kind: input, shape index: {}]
  %s1 = inlined_call_operand.hbm [shape: f32[16,128], index: 1, kind: input, shape index: {}]
  %s2 = inlined_call_operand.hbm [shape: f32[256,128], index: 2, kind: input, shape index: {}]
  %s3 = inlined_call_operand.hbm [shape: f32[128,128], index: 3, kind: input, shape index: {}]
  %s4 = inlined_call_operand.hbm [shape: f32[128,256], index: 4, kind: input, shape index: {}]
  %s5 = inlined_call_operand.hbm [shape: f32[128,128], index: 5, kind: input, shape index: {}]
  %s6 = inlined_call_operand.hbm [shape: f32[128,128], index: 6, kind: input, shape index: {}]
  %s7 = inlined_call_operand.hbm [shape: f32[128,384], index: 7, kind: input, shape index: {}]
  %s8 = inlined_call_operand.hbm [shape: f32[128,256], index: 8, kind: input, shape index: {}]
  %s9 = inlined_call_operand.hbm [shape: f32[8,384], index: 9, kind: input, shape index: {}]
  %s10 = inlined_call_operand.hbm [shape: f32[16,256], index: 10, kind: output, shape index: {0}]
  %s11 = inlined_call_operand.hbm [shape: f32[16,256], index: 11, kind: output, shape index: {1}]
  %12 = xla_tuple %s10, %s11
  %s13 = sld [smem:[#allocation0]]
  $region98: #{tpu_custom_call.1} parent=0
    _
  %s15 = ssub.s32 1, %s13
  %s16 = scalar_select 0, %s15, %s13
  $region1: #{tpu_custom_call.1} parent=0
    #allocation2 [shape = 'u8[16384]{0}', space=vmem, size = 0x4000, scoped, tag = 'input window, operand 0, single buffered']
    #allocation3 [shape = 's32[1]{0}', space=sflag, size = 0x4, scoped, tag = 'scoped memory for tpu_custom_call.1']
    #allocation4 [shape = 's32[1]{0}', space=sflag, size = 0x4, scoped, tag = 'scoped memory for tpu_custom_call.1']
    #allocation5 [shape = 'u8[8192]{0}', space=vmem, size = 0x2000, scoped, tag = 'input window, operand 1, single buffered']
    #allocation6 [shape = 's32[1]{0}', space=sflag, size = 0x4, scoped, tag = 'scoped memory for tpu_custom_call.1']
    #allocation7 [shape = 'u8[131072]{0}', space=vmem, size = 0x20000, scoped, tag = 'input window, operand 2, single buffered']
    #allocation8 [shape = 'u8[65536]{0}', space=vmem, size = 0x10000, scoped, tag = 'input window, operand 3, single buffered']
    #allocation9 [shape = 's32[1]{0}', space=sflag, size = 0x4, scoped, tag = 'scoped memory for tpu_custom_call.1']
    #allocation10 [shape = 'u8[131072]{0}', space=vmem, size = 0x20000, scoped, tag = 'input window, operand 4, single buffered']
    #allocation11 [shape = 'u8[65536]{0}', space=vmem, size = 0x10000, scoped, tag = 'input window, operand 5, single buffered']
    #allocation12 [shape = 's32[1]{0}', space=sflag, size = 0x4, scoped, tag = 'scoped memory for tpu_custom_call.1']
    #allocation13 [shape = 'u8[65536]{0}', space=vmem, size = 0x10000, scoped, tag = 'input window, operand 6, single buffered']
    #allocation14 [shape = 'u8[196608]{0}', space=vmem, size = 0x30000, scoped, tag = 'input window, operand 7, single buffered']
    #allocation15 [shape = 's32[1]{0}', space=sflag, size = 0x4, scoped, tag = 'scoped memory for tpu_custom_call.1']
    #allocation16 [shape = 'u8[131072]{0}', space=vmem, size = 0x20000, scoped, tag = 'input window, operand 8, single buffered']
    #allocation17 [shape = 'u8[12288]{0}', space=vmem, size = 0x3000, scoped, tag = 'input window, operand 9, single buffered']
    #allocation18 [shape = 's32[1]{0}', space=sflag, size = 0x4, scoped, tag = 'scoped memory for tpu_custom_call.1']
    #allocation19 [shape = 'u8[16384]{0}', space=vmem, size = 0x4000, scoped, tag = 'output window, operand 0, single buffered']
    #allocation20 [shape = 'u8[16384]{0}', space=vmem, size = 0x4000, scoped, tag = 'output window, operand 1, single buffered']
    #allocation21 [shape = 's32[1]{0}', space=sflag, size = 0x4, scoped, tag = 'scoped memory for tpu_custom_call.1']
    %17 = vsyncpa [#allocation3], 0
    %18 = vsyncpa [#allocation6], 0
    %19 = vsyncpa [#allocation9], 0
    %20 = vsyncpa [#allocation12], 0
    %21 = vsyncpa [#allocation15], 0
    %22 = vsyncpa [#allocation18], 0
    %23 = vsyncpa [#allocation4], 0
    %24 = vsyncpa [#allocation21], 0
    // Predicated region
    $region2: #{tpu_custom_call.1} parent=1 // pred_check
      _
    $region3: #{tpu_custom_call.1} parent=1 // pred_check_branch
      %26 = sbr.rel (0) target = $region5
    $region4: #{tpu_custom_call.1} parent=1 // pred_region
      %s28 = ssub.s32 512, 512
      %29 = vsyncadd [#allocation3], %s28
      %s30 = sshll.u32 [#allocation2], 4
      %s31 = int_to_ptr.vmem [resolvable:$true] %s30
      %36 = dma.hbm_to_vmem [thread:$0]  %s0, 512, %s31, [#allocation3], 256, 256, 16
    $region5: #{tpu_custom_call.1} parent=1 // pred_fallthru
      _
    // Predicated region
    $region6: #{tpu_custom_call.1} parent=1 // pred_check
      _
    $region7: #{tpu_custom_call.1} parent=1 // pred_check_branch
      %38 = sbr.rel (0) target = $region9
    $region8: #{tpu_custom_call.1} parent=1 // pred_region
      %s40 = ssub.s32 256, 256
      %41 = vsyncadd [#allocation6], %s40
      %s42 = sshll.u32 [#allocation5], 4
      %s43 = int_to_ptr.vmem [resolvable:$true] %s42
      %48 = dma.hbm_to_vmem [thread:$0]  %s1, 256, %s43, [#allocation6], 128, 128, 8
    $region9: #{tpu_custom_call.1} parent=1 // pred_fallthru
      _
    // Predicated region
    $region10: #{tpu_custom_call.1} parent=1 // pred_check
      _
    $region11: #{tpu_custom_call.1} parent=1 // pred_check_branch
      %50 = sbr.rel (0) target = $region13
    $region12: #{tpu_custom_call.1} parent=1 // pred_region
      %s52 = ssub.s32 4096, 4096
      %53 = vsyncadd [#allocation6], %s52
      %s54 = sshll.u32 [#allocation7], 4
      %s55 = int_to_ptr.vmem [resolvable:$true] %s54
      %60 = dma.hbm_to_vmem [thread:$0]  %s2, 4096, %s55, [#allocation6], 128, 128, 8
    $region13: #{tpu_custom_call.1} parent=1 // pred_fallthru
      _
    // Predicated region
    $region14: #{tpu_custom_call.1} parent=1 // pred_check
      _
    $region15: #{tpu_custom_call.1} parent=1 // pred_check_branch
      %62 = sbr.rel (0) target = $region17
    $region16: #{tpu_custom_call.1} parent=1 // pred_region
      %s64 = ssub.s32 2048, 2048
      %65 = vsyncadd [#allocation9], %s64
      %s66 = sshll.u32 [#allocation8], 4
      %s67 = int_to_ptr.vmem [resolvable:$true] %s66
      %72 = dma.hbm_to_vmem [thread:$0]  %s3, 2048, %s67, [#allocation9], 128, 128, 8
    $region17: #{tpu_custom_call.1} parent=1 // pred_fallthru
      _
    // Predicated region
    $region18: #{tpu_custom_call.1} parent=1 // pred_check
      _
    $region19: #{tpu_custom_call.1} parent=1 // pred_check_branch
      %74 = sbr.rel (0) target = $region21
    $region20: #{tpu_custom_call.1} parent=1 // pred_region
      %s76 = ssub.s32 4096, 4096
      %77 = vsyncadd [#allocation9], %s76
      %s78 = sshll.u32 [#allocation10], 4
      %s79 = int_to_ptr.vmem [resolvable:$true] %s78
      %84 = dma.hbm_to_vmem [thread:$0]  %s4, 4096, %s79, [#allocation9], 256, 256, 16
    $region21: #{tpu_custom_call.1} parent=1 // pred_fallthru
      _
    // Predicated region
    $region22: #{tpu_custom_call.1} parent=1 // pred_check
      _
    $region23: #{tpu_custom_call.1} parent=1 // pred_check_branch
      %86 = sbr.rel (0) target = $region25
    $region24: #{tpu_custom_call.1} parent=1 // pred_region
      %s88 = ssub.s32 2048, 2048
      %89 = vsyncadd [#allocation12], %s88
      %s90 = sshll.u32 [#allocation11], 4
      %s91 = int_to_ptr.vmem [resolvable:$true] %s90
      %96 = dma.hbm_to_vmem [thread:$0]  %s5, 2048, %s91, [#allocation12], 128, 128, 8
    $region25: #{tpu_custom_call.1} parent=1 // pred_fallthru
      _
    // Predicated region
    $region26: #{tpu_custom_call.1} parent=1 // pred_check
      _
    $region27: #{tpu_custom_call.1} parent=1 // pred_check_branch
      %98 = sbr.rel (0) target = $region29
    $region28: #{tpu_custom_call.1} parent=1 // pred_region
      %s100 = ssub.s32 2048, 2048
      %101 = vsyncadd [#allocation12], %s100
      %s102 = sshll.u32 [#allocation13], 4
      %s103 = int_to_ptr.vmem [resolvable:$true] %s102
      %108 = dma.hbm_to_vmem [thread:$0]  %s6, 2048, %s103, [#allocation12], 128, 128, 8
    $region29: #{tpu_custom_call.1} parent=1 // pred_fallthru
      _
    // Predicated region
    $region30: #{tpu_custom_call.1} parent=1 // pred_check
      _
    $region31: #{tpu_custom_call.1} parent=1 // pred_check_branch
      %110 = sbr.rel (0) target = $region33
    $region32: #{tpu_custom_call.1} parent=1 // pred_region
      %s112 = ssub.s32 6144, 6144
      %113 = vsyncadd [#allocation15], %s112
      %s114 = sshll.u32 [#allocation14], 4
      %s115 = int_to_ptr.vmem [resolvable:$true] %s114
      %120 = dma.hbm_to_vmem [thread:$0]  %s7, 6144, %s115, [#allocation15], 384, 384, 24
    $region33: #{tpu_custom_call.1} parent=1 // pred_fallthru
      _
    // Predicated region
    $region34: #{tpu_custom_call.1} parent=1 // pred_check
      _
    $region35: #{tpu_custom_call.1} parent=1 // pred_check_branch
      %122 = sbr.rel (0) target = $region37
    $region36: #{tpu_custom_call.1} parent=1 // pred_region
      %s124 = ssub.s32 4096, 4096
      %125 = vsyncadd [#allocation15], %s124
      %s126 = sshll.u32 [#allocation16], 4
      %s127 = int_to_ptr.vmem [resolvable:$true] %s126
      %132 = dma.hbm_to_vmem [thread:$0]  %s8, 4096, %s127, [#allocation15], 256, 256, 16
    $region37: #{tpu_custom_call.1} parent=1 // pred_fallthru
      _
    // Predicated region
    $region38: #{tpu_custom_call.1} parent=1 // pred_check
      _
    $region39: #{tpu_custom_call.1} parent=1 // pred_check_branch
      %134 = sbr.rel (0) target = $region41
    $region40: #{tpu_custom_call.1} parent=1 // pred_region
      %s136 = ssub.s32 384, 384
      %137 = vsyncadd [#allocation18], %s136
      %s139 = sshll.u32 [#allocation17], 4
      %s140 = int_to_ptr.vmem [resolvable:$true] %s139
      %142 = dma.hbm_to_vmem [thread:$0]  %s9, 384, %s140, [#allocation18]
    $region41: #{tpu_custom_call.1} parent=1 // pred_fallthru
      _
    // Predicated region
    $region42: #{tpu_custom_call.1} parent=1 // pred_check
      _
    $region43: #{tpu_custom_call.1} parent=1 // pred_check_branch
      %144 = sbr.rel (0) target = $region45
    $region44: #{tpu_custom_call.1} parent=1 // pred_region
      %145 = dma.done [#allocation3], 512
    $region45: #{tpu_custom_call.1} parent=1 // pred_fallthru
      _
    // Predicated region
    $region46: #{tpu_custom_call.1} parent=1 // pred_check
      _
    $region47: #{tpu_custom_call.1} parent=1 // pred_check_branch
      %147 = sbr.rel (0) target = $region49
    $region48: #{tpu_custom_call.1} parent=1 // pred_region
      %148 = dma.done [#allocation6], 256
    $region49: #{tpu_custom_call.1} parent=1 // pred_fallthru
      _
    // Predicated region
    $region50: #{tpu_custom_call.1} parent=1 // pred_check
      _
    $region51: #{tpu_custom_call.1} parent=1 // pred_check_branch
      %150 = sbr.rel (0) target = $region53
    $region52: #{tpu_custom_call.1} parent=1 // pred_region
      %151 = dma.done [#allocation6], 4096
    $region53: #{tpu_custom_call.1} parent=1 // pred_fallthru
      _
    // Predicated region
    $region54: #{tpu_custom_call.1} parent=1 // pred_check
      _
    $region55: #{tpu_custom_call.1} parent=1 // pred_check_branch
      %153 = sbr.rel (0) target = $region57
    $region56: #{tpu_custom_call.1} parent=1 // pred_region
      %154 = dma.done [#allocation9], 2048
    $region57: #{tpu_custom_call.1} parent=1 // pred_fallthru
      _
    // Predicated region
    $region58: #{tpu_custom_call.1} parent=1 // pred_check
      _
    $region59: #{tpu_custom_call.1} parent=1 // pred_check_branch
      %156 = sbr.rel (0) target = $region61
    $region60: #{tpu_custom_call.1} parent=1 // pred_region
      %157 = dma.done [#allocation9], 4096
    $region61: #{tpu_custom_call.1} parent=1 // pred_fallthru
      _
    // Predicated region
    $region62: #{tpu_custom_call.1} parent=1 // pred_check
      _
    $region63: #{tpu_custom_call.1} parent=1 // pred_check_branch
      %159 = sbr.rel (0) target = $region65
    $region64: #{tpu_custom_call.1} parent=1 // pred_region
      %160 = dma.done [#allocation12], 2048
    $region65: #{tpu_custom_call.1} parent=1 // pred_fallthru
      _
    // Predicated region
    $region66: #{tpu_custom_call.1} parent=1 // pred_check
      _
    $region67: #{tpu_custom_call.1} parent=1 // pred_check_branch
      %162 = sbr.rel (0) target = $region69
    $region68: #{tpu_custom_call.1} parent=1 // pred_region
      %163 = dma.done [#allocation12], 2048
    $region69: #{tpu_custom_call.1} parent=1 // pred_fallthru
      _
    // Predicated region
    $region70: #{tpu_custom_call.1} parent=1 // pred_check
      _
    $region71: #{tpu_custom_call.1} parent=1 // pred_check_branch
      %165 = sbr.rel (0) target = $region73
    $region72: #{tpu_custom_call.1} parent=1 // pred_region
      %166 = dma.done [#allocation15], 6144
    $region73: #{tpu_custom_call.1} parent=1 // pred_fallthru
      _
    // Predicated region
    $region74: #{tpu_custom_call.1} parent=1 // pred_check
      _
    $region75: #{tpu_custom_call.1} parent=1 // pred_check_branch
      %168 = sbr.rel (0) target = $region77
    $region76: #{tpu_custom_call.1} parent=1 // pred_region
      %169 = dma.done [#allocation15], 4096
    $region77: #{tpu_custom_call.1} parent=1 // pred_fallthru
      _
    // Predicated region
    $region78: #{tpu_custom_call.1} parent=1 // pred_check
      _
    $region79: #{tpu_custom_call.1} parent=1 // pred_check_branch
      %171 = sbr.rel (0) target = $region81
    $region80: #{tpu_custom_call.1} parent=1 // pred_region
      %172 = dma.done [#allocation18], 384
    $region81: #{tpu_custom_call.1} parent=1 // pred_fallthru
      _
    %v173 = vld [vmem:[#allocation2] sm:$0xff]
    %v174 = vld [vmem:[#allocation2 + $0x8] sm:$0xff]
    %v175 = vld [vmem:[#allocation2 + $0x10] sm:$0xff]
    %v176 = vld [vmem:[#allocation2 + $0x18] sm:$0xff]
    %v177 = vld [vmem:[#allocation7] sm:$0xff]
    %v178 = vld [vmem:[#allocation7 + $0x8] sm:$0xff]
    %v179 = vld [vmem:[#allocation7 + $0x10] sm:$0xff]
    %v180 = vld [vmem:[#allocation7 + $0x18] sm:$0xff]
    %v181 = vld [vmem:[#allocation7 + $0x20] sm:$0xff]
    %v182 = vld [vmem:[#allocation7 + $0x28] sm:$0xff]
    %v183 = vld [vmem:[#allocation7 + $0x30] sm:$0xff]
    %v184 = vld [vmem:[#allocation7 + $0x38] sm:$0xff]
    %v185 = vld [vmem:[#allocation7 + $0x40] sm:$0xff]
    %v186 = vld [vmem:[#allocation7 + $0x48] sm:$0xff]
    %v187 = vld [vmem:[#allocation7 + $0x50] sm:$0xff]
    %v188 = vld [vmem:[#allocation7 + $0x58] sm:$0xff]
    %v189 = vld [vmem:[#allocation7 + $0x60] sm:$0xff]
    %v190 = vld [vmem:[#allocation7 + $0x68] sm:$0xff]
    %v191 = vld [vmem:[#allocation7 + $0x70] sm:$0xff]
    %v192 = vld [vmem:[#allocation7 + $0x78] sm:$0xff]
    %v193 = vld [vmem:[#allocation7 + $0x80] sm:$0xff]
    %v194 = vld [vmem:[#allocation7 + $0x88] sm:$0xff]
    %v195 = vld [vmem:[#allocation7 + $0x90] sm:$0xff]
    %v196 = vld [vmem:[#allocation7 + $0x98] sm:$0xff]
    %v197 = vld [vmem:[#allocation7 + $0xa0] sm:$0xff]
    %v198 = vld [vmem:[#allocation7 + $0xa8] sm:$0xff]
    %v199 = vld [vmem:[#allocation7 + $0xb0] sm:$0xff]
    %v200 = vld [vmem:[#allocation7 + $0xb8] sm:$0xff]
    %v201 = vld [vmem:[#allocation7 + $0xc0] sm:$0xff]
    %v202 = vld [vmem:[#allocation7 + $0xc8] sm:$0xff]
    %v203 = vld [vmem:[#allocation7 + $0xd0] sm:$0xff]
    %v204 = vld [vmem:[#allocation7 + $0xd8] sm:$0xff]
    %v205 = vld [vmem:[#allocation7 + $0xe0] sm:$0xff]
    %v206 = vld [vmem:[#allocation7 + $0xe8] sm:$0xff]
    %v207 = vld [vmem:[#allocation7 + $0xf0] sm:$0xff]
    %v208 = vld [vmem:[#allocation7 + $0xf8] sm:$0xff]
    %v209 = vld [vmem:[#allocation17] ss:$0 sm:$0xff]
    %210 = vmatprep.subr.mxu0 0.0
    %211 = vmatpush1.msra.mxu0 %v192
    %212 = vmatprep.subr.mxu0 0.0
    %213 = vmatpush1.msra.mxu0 %v191
    %214 = vmatprep.subr.mxu0 0.0
    %215 = vmatpush1.msra.mxu0 %v190
    %216 = vmatprep.subr.mxu0 0.0
    %217 = vmatpush1.msra.mxu0 %v189
    %218 = vmatprep.subr.mxu0 0.0
    %219 = vmatpush1.msra.mxu0 %v188
    %220 = vmatprep.subr.mxu0 0.0
    %221 = vmatpush1.msra.mxu0 %v187
    %222 = vmatprep.subr.mxu0 0.0
    %223 = vmatpush1.msra.mxu0 %v186
    %224 = vmatprep.subr.mxu0 0.0
    %225 = vmatpush1.msra.mxu0 %v185
    %226 = vmatprep.subr.mxu0 0.0
    %227 = vmatpush1.msra.mxu0 %v184
    %228 = vmatprep.subr.mxu0 0.0
    %229 = vmatpush1.msra.mxu0 %v183
    %230 = vmatprep.subr.mxu0 0.0
    %231 = vmatpush1.msra.mxu0 %v182
    %232 = vmatprep.subr.mxu0 0.0
    %233 = vmatpush1.msra.mxu0 %v181
    %234 = vmatprep.subr.mxu0 0.0
    %235 = vmatpush1.msra.mxu0 %v180
    %236 = vmatprep.subr.mxu0 0.0
    %237 = vmatpush1.msra.mxu0 %v179
    %238 = vmatprep.subr.mxu0 0.0
    %239 = vmatpush1.msra.mxu0 %v178
    %240 = vmatprep.subr.mxu0 0.0
    %241 = vmatpush1.msra.mxu0 %v177
    %242 = vmatprep.subr.mxu0 0.0
    %243 = vmatpush2.msra.mxu0 %v208
    %244 = vmatprep.subr.mxu0 0.0
    %245 = vmatpush2.msra.mxu0 %v207
    %246 = vmatprep.subr.mxu0 0.0
    %247 = vmatpush2.msra.mxu0 %v206
    %248 = vmatprep.subr.mxu0 0.0
    %249 = vmatpush2.msra.mxu0 %v205
    %250 = vmatprep.subr.mxu0 0.0
    %251 = vmatpush2.msra.mxu0 %v204
    %252 = vmatprep.subr.mxu0 0.0
    %253 = vmatpush2.msra.mxu0 %v203
    %254 = vmatprep.subr.mxu0 0.0
    %255 = vmatpush2.msra.mxu0 %v202
    %256 = vmatprep.subr.mxu0 0.0
    %257 = vmatpush2.msra.mxu0 %v201
    %258 = vmatprep.subr.mxu0 0.0
    %259 = vmatpush2.msra.mxu0 %v200
    %260 = vmatprep.subr.mxu0 0.0
    %261 = vmatpush2.msra.mxu0 %v199
    %262 = vmatprep.subr.mxu0 0.0
    %263 = vmatpush2.msra.mxu0 %v198
    %264 = vmatprep.subr.mxu0 0.0
    %265 = vmatpush2.msra.mxu0 %v197
    %266 = vmatprep.subr.mxu0 0.0
    %267 = vmatpush2.msra.mxu0 %v196
    %268 = vmatprep.subr.mxu0 0.0
    %269 = vmatpush2.msra.mxu0 %v195
    %270 = vmatprep.subr.mxu0 0.0
    %271 = vmatpush2.msra.mxu0 %v194
    %272 = vmatprep.subr.mxu0 0.0
    %273 = vmatpush2.msra.mxu0 %v193
    %274 = vmatprep.mubr.f32.mxu0 %v174
    %275 = vmatmul.mubr.f32.gmra.mxu0 %v173
    %v276 = vpop.f32.mrf.mxu0
    %v277 = vadd.f32 %v209, %v276
    %v278 = vpop.f32.mrf.mxu0
    %279 = vmatprep.mubr.f32.mxu0 %v176
    %280 = vmatmul.mubr.f32.gmra.mxu0 %v175
    %v281 = vpop.f32.mrf.mxu0
    %v282 = vadd.f32 %v209, %v281
    %v283 = vpop.f32.mrf.mxu0
    %284 = vdwg.mxu0
    %v285 = vmin.f32 %v277, 0.0
    %v286 = vmin.f32 %v282, 0.0
    %v287 = vmul.f32 %v285, 1.442695
    %v288 = vpow.pop %v287
    %v289 = vmul.f32 %v286, 1.442695
    %v290 = vpow.pop %v289
    %v291 = vsub.f32 %v288, 1.0
    %v292 = vsub.f32 %v290, 1.0
    %v293 = vmul.f32 %v291, 1.6732632
    %v294 = vmul.f32 %v292, 1.6732632
    %vm295 = vcmp.gt.f32.partialorder %v277, 0.0
    %vm296 = vcmp.gt.f32.partialorder %v282, 0.0
    %v297 = vsel %vm295, %v277, %v293
    %v298 = vsel %vm296, %v282, %v294
    %v299 = vmul.f32 %v297, 1.050701
    %v300 = vmul.f32 %v298, 1.050701
    %v301 = vld [vmem:[#allocation8] sm:$0xff]
    %v302 = vld [vmem:[#allocation8 + $0x8] sm:$0xff]
    %v303 = vld [vmem:[#allocation8 + $0x10] sm:$0xff]
    %v304 = vld [vmem:[#allocation8 + $0x18] sm:$0xff]
    %v305 = vld [vmem:[#allocation8 + $0x20] sm:$0xff]
    %v306 = vld [vmem:[#allocation8 + $0x28] sm:$0xff]
    %v307 = vld [vmem:[#allocation8 + $0x30] sm:$0xff]
    %v308 = vld [vmem:[#allocation8 + $0x38] sm:$0xff]
    %v309 = vld [vmem:[#allocation8 + $0x40] sm:$0xff]
    %v310 = vld [vmem:[#allocation8 + $0x48] sm:$0xff]
    %v311 = vld [vmem:[#allocation8 + $0x50] sm:$0xff]
    %v312 = vld [vmem:[#allocation8 + $0x58] sm:$0xff]
    %v313 = vld [vmem:[#allocation8 + $0x60] sm:$0xff]
    %v314 = vld [vmem:[#allocation8 + $0x68] sm:$0xff]
    %v315 = vld [vmem:[#allocation8 + $0x70] sm:$0xff]
    %v316 = vld [vmem:[#allocation8 + $0x78] sm:$0xff]
    %v317 = vld [vmem:[#allocation17 + $0x1] ss:$0 sm:$0xff]
    %318 = vmatprep.subr.mxu0 0.0
    %319 = vmatpush1.msra.mxu0 %v316
    %320 = vmatprep.subr.mxu0 0.0
    %321 = vmatpush1.msra.mxu0 %v315
    %322 = vmatprep.subr.mxu0 0.0
    %323 = vmatpush1.msra.mxu0 %v314
    %324 = vmatprep.subr.mxu0 0.0
    %325 = vmatpush1.msra.mxu0 %v313
    %326 = vmatprep.subr.mxu0 0.0
    %327 = vmatpush1.msra.mxu0 %v312
    %328 = vmatprep.subr.mxu0 0.0
    %329 = vmatpush1.msra.mxu0 %v311
    %330 = vmatprep.subr.mxu0 0.0
    %331 = vmatpush1.msra.mxu0 %v310
    %332 = vmatprep.subr.mxu0 0.0
    %333 = vmatpush1.msra.mxu0 %v309
    %334 = vmatprep.subr.mxu0 0.0
    %335 = vmatpush1.msra.mxu0 %v308
    %336 = vmatprep.subr.mxu0 0.0
    %337 = vmatpush1.msra.mxu0 %v307
    %338 = vmatprep.subr.mxu0 0.0
    %339 = vmatpush1.msra.mxu0 %v306
    %340 = vmatprep.subr.mxu0 0.0
    %341 = vmatpush1.msra.mxu0 %v305
    %342 = vmatprep.subr.mxu0 0.0
    %343 = vmatpush1.msra.mxu0 %v304
    %344 = vmatprep.subr.mxu0 0.0
    %345 = vmatpush1.msra.mxu0 %v303
    %346 = vmatprep.subr.mxu0 0.0
    %347 = vmatpush1.msra.mxu0 %v302
    %348 = vmatprep.subr.mxu0 0.0
    %349 = vmatpush1.msra.mxu0 %v301
    %350 = vmatprep.subr.mxu0 0.0
    %351 = vmatpush2.msra.mxu0 0.0
    %352 = vmatprep.subr.mxu0 0.0
    %353 = vmatpush2.msra.mxu0 0.0
    %354 = vmatprep.subr.mxu0 0.0
    %355 = vmatpush2.msra.mxu0 0.0
    %356 = vmatprep.subr.mxu0 0.0
    %357 = vmatpush2.msra.mxu0 0.0
    %358 = vmatprep.subr.mxu0 0.0
    %359 = vmatpush2.msra.mxu0 0.0
    %360 = vmatprep.subr.mxu0 0.0
    %361 = vmatpush2.msra.mxu0 0.0
    %362 = vmatprep.subr.mxu0 0.0
    %363 = vmatpush2.msra.mxu0 0.0
    %364 = vmatprep.subr.mxu0 0.0
    %365 = vmatpush2.msra.mxu0 0.0
    %366 = vmatprep.subr.mxu0 0.0
    %367 = vmatpush2.msra.mxu0 0.0
    %368 = vmatprep.subr.mxu0 0.0
    %369 = vmatpush2.msra.mxu0 0.0
    %370 = vmatprep.subr.mxu0 0.0
    %371 = vmatpush2.msra.mxu0 0.0
    %372 = vmatprep.subr.mxu0 0.0
    %373 = vmatpush2.msra.mxu0 0.0
    %374 = vmatprep.subr.mxu0 0.0
    %375 = vmatpush2.msra.mxu0 0.0
    %376 = vmatprep.subr.mxu0 0.0
    %377 = vmatpush2.msra.mxu0 0.0
    %378 = vmatprep.subr.mxu0 0.0
    %379 = vmatpush2.msra.mxu0 0.0
    %380 = vmatprep.subr.mxu0 0.0
    %381 = vmatpush2.msra.mxu0 0.0
    %382 = vmatprep.mubr.f32.mxu0 0.0
    %383 = vmatmul.mubr.f32.gmra.mxu0 %v299
    %v384 = vpop.f32.mrf.mxu0
    %v385 = vadd.f32 %v317, %v384
    %v386 = vpop.f32.mrf.mxu0
    %387 = vmatprep.mubr.f32.mxu0 0.0
    %388 = vmatmul.mubr.f32.gmra.mxu0 %v300
    %v389 = vpop.f32.mrf.mxu0
    %v390 = vadd.f32 %v317, %v389
    %v391 = vpop.f32.mrf.mxu0
    %392 = vdwg.mxu0
    %v393 = vmin.f32 %v385, 0.0
    %v394 = vmin.f32 %v390, 0.0
    %v395 = vmul.f32 %v393, 1.442695
    %v396 = vpow.pop %v395
    %v397 = vmul.f32 %v394, 1.442695
    %v398 = vpow.pop %v397
    %v399 = vsub.f32 %v396, 1.0
    %v400 = vsub.f32 %v398, 1.0
    %v401 = vmul.f32 %v399, 1.6732632
    %v402 = vmul.f32 %v400, 1.6732632
    %vm403 = vcmp.gt.f32.partialorder %v385, 0.0
    %vm404 = vcmp.gt.f32.partialorder %v390, 0.0
    %v405 = vsel %vm403, %v385, %v401
    %v406 = vsel %vm404, %v390, %v402
    %v407 = vmul.f32 %v405, 1.050701
    %v408 = vmul.f32 %v406, 1.050701
    %v409 = vld [vmem:[#allocation10] sm:$0xff]
    %v410 = vld [vmem:[#allocation10 + $0x8] sm:$0xff]
    %v411 = vld [vmem:[#allocation10 + $0x10] sm:$0xff]
    %v412 = vld [vmem:[#allocation10 + $0x18] sm:$0xff]
    %v413 = vld [vmem:[#allocation10 + $0x20] sm:$0xff]
    %v414 = vld [vmem:[#allocation10 + $0x28] sm:$0xff]
    %v415 = vld [vmem:[#allocation10 + $0x30] sm:$0xff]
    %v416 = vld [vmem:[#allocation10 + $0x38] sm:$0xff]
    %v417 = vld [vmem:[#allocation10 + $0x40] sm:$0xff]
    %v418 = vld [vmem:[#allocation10 + $0x48] sm:$0xff]
    %v419 = vld [vmem:[#allocation10 + $0x50] sm:$0xff]
    %v420 = vld [vmem:[#allocation10 + $0x58] sm:$0xff]
    %v421 = vld [vmem:[#allocation10 + $0x60] sm:$0xff]
    %v422 = vld [vmem:[#allocation10 + $0x68] sm:$0xff]
    %v423 = vld [vmem:[#allocation10 + $0x70] sm:$0xff]
    %v424 = vld [vmem:[#allocation10 + $0x78] sm:$0xff]
    %v425 = vld [vmem:[#allocation10 + $0x80] sm:$0xff]
    %v426 = vld [vmem:[#allocation10 + $0x88] sm:$0xff]
    %v427 = vld [vmem:[#allocation10 + $0x90] sm:$0xff]
    %v428 = vld [vmem:[#allocation10 + $0x98] sm:$0xff]
    %v429 = vld [vmem:[#allocation10 + $0xa0] sm:$0xff]
    %v430 = vld [vmem:[#allocation10 + $0xa8] sm:$0xff]
    %v431 = vld [vmem:[#allocation10 + $0xb0] sm:$0xff]
    %v432 = vld [vmem:[#allocation10 + $0xb8] sm:$0xff]
    %v433 = vld [vmem:[#allocation10 + $0xc0] sm:$0xff]
    %v434 = vld [vmem:[#allocation10 + $0xc8] sm:$0xff]
    %v435 = vld [vmem:[#allocation10 + $0xd0] sm:$0xff]
    %v436 = vld [vmem:[#allocation10 + $0xd8] sm:$0xff]
    %v437 = vld [vmem:[#allocation10 + $0xe0] sm:$0xff]
    %v438 = vld [vmem:[#allocation10 + $0xe8] sm:$0xff]
    %v439 = vld [vmem:[#allocation10 + $0xf0] sm:$0xff]
    %v440 = vld [vmem:[#allocation10 + $0xf8] sm:$0xff]
    %s441 = scalar_lea.vmem [#allocation17], 2
    %v442 = vld [vmem:[%s441] ss:$8 sm:$0x3]
    %v444 = vlaneseq
    %v445 = vshrl.u32 %v444, 7
    %v446 = vsub.s32 0, %v445
    %v447 = vrot.slane %v442, %v446
    %v448 = vlaneseq
    %v449 = vshrl.u32 %v448, 7
    %v450 = vsub.s32 1, %v449
    %v451 = vrot.slane %v442, %v450
    %454 = vmatprep.subr.mxu0 %v440
    %455 = vmatpush1.msra.mxu0 %v439
    %456 = vmatprep.subr.mxu0 %v438
    %457 = vmatpush1.msra.mxu0 %v437
    %458 = vmatprep.subr.mxu0 %v436
    %459 = vmatpush1.msra.mxu0 %v435
    %460 = vmatprep.subr.mxu0 %v434
    %461 = vmatpush1.msra.mxu0 %v433
    %462 = vmatprep.subr.mxu0 %v432
    %463 = vmatpush1.msra.mxu0 %v431
    %464 = vmatprep.subr.mxu0 %v430
    %465 = vmatpush1.msra.mxu0 %v429
    %466 = vmatprep.subr.mxu0 %v428
    %467 = vmatpush1.msra.mxu0 %v427
    %468 = vmatprep.subr.mxu0 %v426
    %469 = vmatpush1.msra.mxu0 %v425
    %470 = vmatprep.subr.mxu0 %v424
    %471 = vmatpush1.msra.mxu0 %v423
    %472 = vmatprep.subr.mxu0 %v422
    %473 = vmatpush1.msra.mxu0 %v421
    %474 = vmatprep.subr.mxu0 %v420
    %475 = vmatpush1.msra.mxu0 %v419
    %476 = vmatprep.subr.mxu0 %v418
    %477 = vmatpush1.msra.mxu0 %v417
    %478 = vmatprep.subr.mxu0 %v416
    %479 = vmatpush1.msra.mxu0 %v415
    %480 = vmatprep.subr.mxu0 %v414
    %481 = vmatpush1.msra.mxu0 %v413
    %482 = vmatprep.subr.mxu0 %v412
    %483 = vmatpush1.msra.mxu0 %v411
    %484 = vmatprep.subr.mxu0 %v410
    %485 = vmatpush1.msra.mxu0 %v409
    %486 = vmatprep.subr.mxu0 0.0
    %487 = vmatpush2.msra.mxu0 0.0
    %488 = vmatprep.subr.mxu0 0.0
    %489 = vmatpush2.msra.mxu0 0.0
    %490 = vmatprep.subr.mxu0 0.0
    %491 = vmatpush2.msra.mxu0 0.0
    %492 = vmatprep.subr.mxu0 0.0
    %493 = vmatpush2.msra.mxu0 0.0
    %494 = vmatprep.subr.mxu0 0.0
    %495 = vmatpush2.msra.mxu0 0.0
    %496 = vmatprep.subr.mxu0 0.0
    %497 = vmatpush2.msra.mxu0 0.0
    %498 = vmatprep.subr.mxu0 0.0
    %499 = vmatpush2.msra.mxu0 0.0
    %500 = vmatprep.subr.mxu0 0.0
    %501 = vmatpush2.msra.mxu0 0.0
    %502 = vmatprep.subr.mxu0 0.0
    %503 = vmatpush2.msra.mxu0 0.0
    %504 = vmatprep.subr.mxu0 0.0
    %505 = vmatpush2.msra.mxu0 0.0
    %506 = vmatprep.subr.mxu0 0.0
    %507 = vmatpush2.msra.mxu0 0.0
    %508 = vmatprep.subr.mxu0 0.0
    %509 = vmatpush2.msra.mxu0 0.0
    %510 = vmatprep.subr.mxu0 0.0
    %511 = vmatpush2.msra.mxu0 0.0
    %512 = vmatprep.subr.mxu0 0.0
    %513 = vmatpush2.msra.mxu0 0.0
    %514 = vmatprep.subr.mxu0 0.0
    %515 = vmatpush2.msra.mxu0 0.0
    %516 = vmatprep.subr.mxu0 0.0
    %517 = vmatpush2.msra.mxu0 0.0
    %518 = vmatprep.mubr.f32.mxu0 0.0
    %519 = vmatmul.mubr.f32.gmra.mxu0 %v407
    %v520 = vpop.f32.mrf.mxu0
    %v521 = vadd.f32 %v447, %v520
    %v522 = vpop.f32.mrf.mxu0
    %v523 = vadd.f32 %v451, %v522
    %524 = vmatprep.mubr.f32.mxu0 0.0
    %525 = vmatmul.mubr.f32.gmra.mxu0 %v408
    %v526 = vpop.f32.mrf.mxu0
    %v527 = vadd.f32 %v447, %v526
    %v528 = vpop.f32.mrf.mxu0
    %v529 = vadd.f32 %v451, %v528
    %530 = vdwg.mxu0
    %531 = vst [vmem:[#allocation20] sm:$0xff] %v521
    %532 = vst [vmem:[#allocation20 + $0x8] sm:$0xff] %v523
    %533 = vst [vmem:[#allocation20 + $0x10] sm:$0xff] %v527
    %534 = vst [vmem:[#allocation20 + $0x18] sm:$0xff] %v529
    %v535 = vld [vmem:[#allocation5] sm:$0xff]
    %v536 = vld [vmem:[#allocation5 + $0x8] sm:$0xff]
    %v537 = vmul.f32 %v523, 0.5
    %v538 = vmul.f32 %v529, 0.5
    %v539 = vmul.f32 %v537, 1.442695
    %v540 = vpow.pop %v539
    %v541 = vmul.f32 %v538, 1.442695
    %v542 = vpow.pop %v541
    %v543 = vmul.f32 %v535, %v540
    %v544 = vmul.f32 %v536, %v542
    %v545 = vadd.f32 %v543, %v521
    %v546 = vadd.f32 %v544, %v527
    %v547 = vld [vmem:[#allocation11] sm:$0xff]
    %v548 = vld [vmem:[#allocation11 + $0x8] sm:$0xff]
    %v549 = vld [vmem:[#allocation11 + $0x10] sm:$0xff]
    %v550 = vld [vmem:[#allocation11 + $0x18] sm:$0xff]
    %v551 = vld [vmem:[#allocation11 + $0x20] sm:$0xff]
    %v552 = vld [vmem:[#allocation11 + $0x28] sm:$0xff]
    %v553 = vld [vmem:[#allocation11 + $0x30] sm:$0xff]
    %v554 = vld [vmem:[#allocation11 + $0x38] sm:$0xff]
    %v555 = vld [vmem:[#allocation11 + $0x40] sm:$0xff]
    %v556 = vld [vmem:[#allocation11 + $0x48] sm:$0xff]
    %v557 = vld [vmem:[#allocation11 + $0x50] sm:$0xff]
    %v558 = vld [vmem:[#allocation11 + $0x58] sm:$0xff]
    %v559 = vld [vmem:[#allocation11 + $0x60] sm:$0xff]
    %v560 = vld [vmem:[#allocation11 + $0x68] sm:$0xff]
    %v561 = vld [vmem:[#allocation11 + $0x70] sm:$0xff]
    %v562 = vld [vmem:[#allocation11 + $0x78] sm:$0xff]
    %v563 = vld [vmem:[#allocation17 + $0x3] ss:$0 sm:$0xff]
    %564 = vmatprep.subr.mxu0 0.0
    %565 = vmatpush1.msra.mxu0 %v562
    %566 = vmatprep.subr.mxu0 0.0
    %567 = vmatpush1.msra.mxu0 %v561
    %568 = vmatprep.subr.mxu0 0.0
    %569 = vmatpush1.msra.mxu0 %v560
    %570 = vmatprep.subr.mxu0 0.0
    %571 = vmatpush1.msra.mxu0 %v559
    %572 = vmatprep.subr.mxu0 0.0
    %573 = vmatpush1.msra.mxu0 %v558
    %574 = vmatprep.subr.mxu0 0.0
    %575 = vmatpush1.msra.mxu0 %v557
    %576 = vmatprep.subr.mxu0 0.0
    %577 = vmatpush1.msra.mxu0 %v556
    %578 = vmatprep.subr.mxu0 0.0
    %579 = vmatpush1.msra.mxu0 %v555
    %580 = vmatprep.subr.mxu0 0.0
    %581 = vmatpush1.msra.mxu0 %v554
    %582 = vmatprep.subr.mxu0 0.0
    %583 = vmatpush1.msra.mxu0 %v553
    %584 = vmatprep.subr.mxu0 0.0
    %585 = vmatpush1.msra.mxu0 %v552
    %586 = vmatprep.subr.mxu0 0.0
    %587 = vmatpush1.msra.mxu0 %v551
    %588 = vmatprep.subr.mxu0 0.0
    %589 = vmatpush1.msra.mxu0 %v550
    %590 = vmatprep.subr.mxu0 0.0
    %591 = vmatpush1.msra.mxu0 %v549
    %592 = vmatprep.subr.mxu0 0.0
    %593 = vmatpush1.msra.mxu0 %v548
    %594 = vmatprep.subr.mxu0 0.0
    %595 = vmatpush1.msra.mxu0 %v547
    %596 = vmatprep.subr.mxu0 0.0
    %597 = vmatpush2.msra.mxu0 0.0
    %598 = vmatprep.subr.mxu0 0.0
    %599 = vmatpush2.msra.mxu0 0.0
    %600 = vmatprep.subr.mxu0 0.0
    %601 = vmatpush2.msra.mxu0 0.0
    %602 = vmatprep.subr.mxu0 0.0
    %603 = vmatpush2.msra.mxu0 0.0
    %604 = vmatprep.subr.mxu0 0.0
    %605 = vmatpush2.msra.mxu0 0.0
    %606 = vmatprep.subr.mxu0 0.0
    %607 = vmatpush2.msra.mxu0 0.0
    %608 = vmatprep.subr.mxu0 0.0
    %609 = vmatpush2.msra.mxu0 0.0
    %610 = vmatprep.subr.mxu0 0.0
    %611 = vmatpush2.msra.mxu0 0.0
    %612 = vmatprep.subr.mxu0 0.0
    %613 = vmatpush2.msra.mxu0 0.0
    %614 = vmatprep.subr.mxu0 0.0
    %615 = vmatpush2.msra.mxu0 0.0
    %616 = vmatprep.subr.mxu0 0.0
    %617 = vmatpush2.msra.mxu0 0.0
    %618 = vmatprep.subr.mxu0 0.0
    %619 = vmatpush2.msra.mxu0 0.0
    %620 = vmatprep.subr.mxu0 0.0
    %621 = vmatpush2.msra.mxu0 0.0
    %622 = vmatprep.subr.mxu0 0.0
    %623 = vmatpush2.msra.mxu0 0.0
    %624 = vmatprep.subr.mxu0 0.0
    %625 = vmatpush2.msra.mxu0 0.0
    %626 = vmatprep.subr.mxu0 0.0
    %627 = vmatpush2.msra.mxu0 0.0
    %628 = vmatprep.mubr.f32.mxu0 0.0
    %629 = vmatmul.mubr.f32.gmra.mxu0 %v545
    %v630 = vpop.f32.mrf.mxu0
    %v631 = vadd.f32 %v563, %v630
    %v632 = vpop.f32.mrf.mxu0
    %633 = vmatprep.mubr.f32.mxu0 0.0
    %634 = vmatmul.mubr.f32.gmra.mxu0 %v546
    %v635 = vpop.f32.mrf.mxu0
    %v636 = vadd.f32 %v563, %v635
    %v637 = vpop.f32.mrf.mxu0
    %638 = vdwg.mxu0
    %v639 = vmin.f32 %v631, 0.0
    %v640 = vmin.f32 %v636, 0.0
    %v641 = vmul.f32 %v639, 1.442695
    %v642 = vpow.pop %v641
    %v643 = vmul.f32 %v640, 1.442695
    %v644 = vpow.pop %v643
    %v645 = vsub.f32 %v642, 1.0
    %v646 = vsub.f32 %v644, 1.0
    %v647 = vmul.f32 %v645, 1.6732632
    %v648 = vmul.f32 %v646, 1.6732632
    %vm649 = vcmp.gt.f32.partialorder %v631, 0.0
    %vm650 = vcmp.gt.f32.partialorder %v636, 0.0
    %v651 = vsel %vm649, %v631, %v647
    %v652 = vsel %vm650, %v636, %v648
    %v653 = vmul.f32 %v651, 1.050701
    %v654 = vmul.f32 %v652, 1.050701
    %v655 = vld [vmem:[#allocation13] sm:$0xff]
    %v656 = vld [vmem:[#allocation13 + $0x8] sm:$0xff]
    %v657 = vld [vmem:[#allocation13 + $0x10] sm:$0xff]
    %v658 = vld [vmem:[#allocation13 + $0x18] sm:$0xff]
    %v659 = vld [vmem:[#allocation13 + $0x20] sm:$0xff]
    %v660 = vld [vmem:[#allocation13 + $0x28] sm:$0xff]
    %v661 = vld [vmem:[#allocation13 + $0x30] sm:$0xff]
    %v662 = vld [vmem:[#allocation13 + $0x38] sm:$0xff]
    %v663 = vld [vmem:[#allocation13 + $0x40] sm:$0xff]
    %v664 = vld [vmem:[#allocation13 + $0x48] sm:$0xff]
    %v665 = vld [vmem:[#allocation13 + $0x50] sm:$0xff]
    %v666 = vld [vmem:[#allocation13 + $0x58] sm:$0xff]
    %v667 = vld [vmem:[#allocation13 + $0x60] sm:$0xff]
    %v668 = vld [vmem:[#allocation13 + $0x68] sm:$0xff]
    %v669 = vld [vmem:[#allocation13 + $0x70] sm:$0xff]
    %v670 = vld [vmem:[#allocation13 + $0x78] sm:$0xff]
    %v671 = vld [vmem:[#allocation17 + $0x4] ss:$0 sm:$0xff]
    %672 = vmatprep.subr.mxu0 0.0
    %673 = vmatpush1.msra.mxu0 %v670
    %674 = vmatprep.subr.mxu0 0.0
    %675 = vmatpush1.msra.mxu0 %v669
    %676 = vmatprep.subr.mxu0 0.0
    %677 = vmatpush1.msra.mxu0 %v668
    %678 = vmatprep.subr.mxu0 0.0
    %679 = vmatpush1.msra.mxu0 %v667
    %680 = vmatprep.subr.mxu0 0.0
    %681 = vmatpush1.msra.mxu0 %v666
    %682 = vmatprep.subr.mxu0 0.0
    %683 = vmatpush1.msra.mxu0 %v665
    %684 = vmatprep.subr.mxu0 0.0
    %685 = vmatpush1.msra.mxu0 %v664
    %686 = vmatprep.subr.mxu0 0.0
    %687 = vmatpush1.msra.mxu0 %v663
    %688 = vmatprep.subr.mxu0 0.0
    %689 = vmatpush1.msra.mxu0 %v662
    %690 = vmatprep.subr.mxu0 0.0
    %691 = vmatpush1.msra.mxu0 %v661
    %692 = vmatprep.subr.mxu0 0.0
    %693 = vmatpush1.msra.mxu0 %v660
    %694 = vmatprep.subr.mxu0 0.0
    %695 = vmatpush1.msra.mxu0 %v659
    %696 = vmatprep.subr.mxu0 0.0
    %697 = vmatpush1.msra.mxu0 %v658
    %698 = vmatprep.subr.mxu0 0.0
    %699 = vmatpush1.msra.mxu0 %v657
    %700 = vmatprep.subr.mxu0 0.0
    %701 = vmatpush1.msra.mxu0 %v656
    %702 = vmatprep.subr.mxu0 0.0
    %703 = vmatpush1.msra.mxu0 %v655
    %704 = vmatprep.subr.mxu0 0.0
    %705 = vmatpush2.msra.mxu0 0.0
    %706 = vmatprep.subr.mxu0 0.0
    %707 = vmatpush2.msra.mxu0 0.0
    %708 = vmatprep.subr.mxu0 0.0
    %709 = vmatpush2.msra.mxu0 0.0
    %710 = vmatprep.subr.mxu0 0.0
    %711 = vmatpush2.msra.mxu0 0.0
    %712 = vmatprep.subr.mxu0 0.0
    %713 = vmatpush2.msra.mxu0 0.0
    %714 = vmatprep.subr.mxu0 0.0
    %715 = vmatpush2.msra.mxu0 0.0
    %716 = vmatprep.subr.mxu0 0.0
    %717 = vmatpush2.msra.mxu0 0.0
    %718 = vmatprep.subr.mxu0 0.0
    %719 = vmatpush2.msra.mxu0 0.0
    %720 = vmatprep.subr.mxu0 0.0
    %721 = vmatpush2.msra.mxu0 0.0
    %722 = vmatprep.subr.mxu0 0.0
    %723 = vmatpush2.msra.mxu0 0.0
    %724 = vmatprep.subr.mxu0 0.0
    %725 = vmatpush2.msra.mxu0 0.0
    %726 = vmatprep.subr.mxu0 0.0
    %727 = vmatpush2.msra.mxu0 0.0
    %728 = vmatprep.subr.mxu0 0.0
    %729 = vmatpush2.msra.mxu0 0.0
    %730 = vmatprep.subr.mxu0 0.0
    %731 = vmatpush2.msra.mxu0 0.0
    %732 = vmatprep.subr.mxu0 0.0
    %733 = vmatpush2.msra.mxu0 0.0
    %734 = vmatprep.subr.mxu0 0.0
    %735 = vmatpush2.msra.mxu0 0.0
    %736 = vmatprep.mubr.f32.mxu0 0.0
    %737 = vmatmul.mubr.f32.gmra.mxu0 %v653
    %v738 = vpop.f32.mrf.mxu0
    %v739 = vadd.f32 %v671, %v738
    %v740 = vpop.f32.mrf.mxu0
    %741 = vmatprep.mubr.f32.mxu0 0.0
    %742 = vmatmul.mubr.f32.gmra.mxu0 %v654
    %v743 = vpop.f32.mrf.mxu0
    %v744 = vadd.f32 %v671, %v743
    %v745 = vpop.f32.mrf.mxu0
    %746 = vdwg.mxu0
    %v747 = vmin.f32 %v739, 0.0
    %v748 = vmin.f32 %v744, 0.0
    %v749 = vmul.f32 %v747, 1.442695
    %v750 = vpow.pop %v749
    %v751 = vmul.f32 %v748, 1.442695
    %v752 = vpow.pop %v751
    %v753 = vsub.f32 %v750, 1.0
    %v754 = vsub.f32 %v752, 1.0
    %v755 = vmul.f32 %v753, 1.6732632
    %v756 = vmul.f32 %v754, 1.6732632
    %vm757 = vcmp.gt.f32.partialorder %v739, 0.0
    %vm758 = vcmp.gt.f32.partialorder %v744, 0.0
    %v759 = vsel %vm757, %v739, %v755
    %v760 = vsel %vm758, %v744, %v756
    %v761 = vmul.f32 %v759, 1.050701
    %v762 = vmul.f32 %v760, 1.050701
    %v763 = vld [vmem:[#allocation14] sm:$0xff]
    %v764 = vld [vmem:[#allocation14 + $0x8] sm:$0xff]
    %v765 = vld [vmem:[#allocation14 + $0x10] sm:$0xff]
    %v766 = vld [vmem:[#allocation14 + $0x18] sm:$0xff]
    %v767 = vld [vmem:[#allocation14 + $0x20] sm:$0xff]
    %v768 = vld [vmem:[#allocation14 + $0x28] sm:$0xff]
    %v769 = vld [vmem:[#allocation14 + $0x30] sm:$0xff]
    %v770 = vld [vmem:[#allocation14 + $0x38] sm:$0xff]
    %v771 = vld [vmem:[#allocation14 + $0x40] sm:$0xff]
    %v772 = vld [vmem:[#allocation14 + $0x48] sm:$0xff]
    %v773 = vld [vmem:[#allocation14 + $0x50] sm:$0xff]
    %v774 = vld [vmem:[#allocation14 + $0x58] sm:$0xff]
    %v775 = vld [vmem:[#allocation14 + $0x60] sm:$0xff]
    %v776 = vld [vmem:[#allocation14 + $0x68] sm:$0xff]
    %v777 = vld [vmem:[#allocation14 + $0x70] sm:$0xff]
    %v778 = vld [vmem:[#allocation14 + $0x78] sm:$0xff]
    %v779 = vld [vmem:[#allocation14 + $0x80] sm:$0xff]
    %v780 = vld [vmem:[#allocation14 + $0x88] sm:$0xff]
    %v781 = vld [vmem:[#allocation14 + $0x90] sm:$0xff]
    %v782 = vld [vmem:[#allocation14 + $0x98] sm:$0xff]
    %v783 = vld [vmem:[#allocation14 + $0xa0] sm:$0xff]
    %v784 = vld [vmem:[#allocation14 + $0xa8] sm:$0xff]
    %v785 = vld [vmem:[#allocation14 + $0xb0] sm:$0xff]
    %v786 = vld [vmem:[#allocation14 + $0xb8] sm:$0xff]
    %v787 = vld [vmem:[#allocation14 + $0xc0] sm:$0xff]
    %v788 = vld [vmem:[#allocation14 + $0xc8] sm:$0xff]
    %v789 = vld [vmem:[#allocation14 + $0xd0] sm:$0xff]
    %v790 = vld [vmem:[#allocation14 + $0xd8] sm:$0xff]
    %v791 = vld [vmem:[#allocation14 + $0xe0] sm:$0xff]
    %v792 = vld [vmem:[#allocation14 + $0xe8] sm:$0xff]
    %v793 = vld [vmem:[#allocation14 + $0xf0] sm:$0xff]
    %v794 = vld [vmem:[#allocation14 + $0xf8] sm:$0xff]
    %v795 = vld [vmem:[#allocation14 + $0x100] sm:$0xff]
    %v796 = vld [vmem:[#allocation14 + $0x108] sm:$0xff]
    %v797 = vld [vmem:[#allocation14 + $0x110] sm:$0xff]
    %v798 = vld [vmem:[#allocation14 + $0x118] sm:$0xff]
    %v799 = vld [vmem:[#allocation14 + $0x120] sm:$0xff]
    %v800 = vld [vmem:[#allocation14 + $0x128] sm:$0xff]
    %v801 = vld [vmem:[#allocation14 + $0x130] sm:$0xff]
    %v802 = vld [vmem:[#allocation14 + $0x138] sm:$0xff]
    %v803 = vld [vmem:[#allocation14 + $0x140] sm:$0xff]
    %v804 = vld [vmem:[#allocation14 + $0x148] sm:$0xff]
    %v805 = vld [vmem:[#allocation14 + $0x150] sm:$0xff]
    %v806 = vld [vmem:[#allocation14 + $0x158] sm:$0xff]
    %v807 = vld [vmem:[#allocation14 + $0x160] sm:$0xff]
    %v808 = vld [vmem:[#allocation14 + $0x168] sm:$0xff]
    %v809 = vld [vmem:[#allocation14 + $0x170] sm:$0xff]
    %v810 = vld [vmem:[#allocation14 + $0x178] sm:$0xff]
    %s811 = scalar_lea.vmem [#allocation17], 5
    %v812 = vld [vmem:[%s811] ss:$8 sm:$0x7]
    %v814 = vlaneseq
    %v815 = vshrl.u32 %v814, 7
    %v816 = vsub.s32 0, %v815
    %v817 = vrot.slane %v812, %v816
    %v818 = vlaneseq
    %v819 = vshrl.u32 %v818, 7
    %v820 = vsub.s32 1, %v819
    %v821 = vrot.slane %v812, %v820
    %v822 = vlaneseq
    %v823 = vshrl.u32 %v822, 7
    %v824 = vsub.s32 2, %v823
    %v825 = vrot.slane %v812, %v824
    %829 = vmatprep.subr.mxu0 %v809
    %830 = vmatpush1.msra.mxu0 %v808
    %831 = vmatprep.subr.mxu0 %v806
    %832 = vmatpush1.msra.mxu0 %v805
    %833 = vmatprep.subr.mxu0 %v803
    %834 = vmatpush1.msra.mxu0 %v802
    %835 = vmatprep.subr.mxu0 %v800
    %836 = vmatpush1.msra.mxu0 %v799
    %837 = vmatprep.subr.mxu0 %v797
    %838 = vmatpush1.msra.mxu0 %v796
    %839 = vmatprep.subr.mxu0 %v794
    %840 = vmatpush1.msra.mxu0 %v793
    %841 = vmatprep.subr.mxu0 %v791
    %842 = vmatpush1.msra.mxu0 %v790
    %843 = vmatprep.subr.mxu0 %v788
    %844 = vmatpush1.msra.mxu0 %v787
    %845 = vmatprep.subr.mxu0 %v785
    %846 = vmatpush1.msra.mxu0 %v784
    %847 = vmatprep.subr.mxu0 %v782
    %848 = vmatpush1.msra.mxu0 %v781
    %849 = vmatprep.subr.mxu0 %v779
    %850 = vmatpush1.msra.mxu0 %v778
    %851 = vmatprep.subr.mxu0 %v776
    %852 = vmatpush1.msra.mxu0 %v775
    %853 = vmatprep.subr.mxu0 %v773
    %854 = vmatpush1.msra.mxu0 %v772
    %855 = vmatprep.subr.mxu0 %v770
    %856 = vmatpush1.msra.mxu0 %v769
    %857 = vmatprep.subr.mxu0 %v767
    %858 = vmatpush1.msra.mxu0 %v766
    %859 = vmatprep.subr.mxu0 %v764
    %860 = vmatpush1.msra.mxu0 %v763
    %861 = vmatprep.subr.mxu0 0.0
    %862 = vmatpush2.msra.mxu0 0.0
    %863 = vmatprep.subr.mxu0 0.0
    %864 = vmatpush2.msra.mxu0 0.0
    %865 = vmatprep.subr.mxu0 0.0
    %866 = vmatpush2.msra.mxu0 0.0
    %867 = vmatprep.subr.mxu0 0.0
    %868 = vmatpush2.msra.mxu0 0.0
    %869 = vmatprep.subr.mxu0 0.0
    %870 = vmatpush2.msra.mxu0 0.0
    %871 = vmatprep.subr.mxu0 0.0
    %872 = vmatpush2.msra.mxu0 0.0
    %873 = vmatprep.subr.mxu0 0.0
    %874 = vmatpush2.msra.mxu0 0.0
    %875 = vmatprep.subr.mxu0 0.0
    %876 = vmatpush2.msra.mxu0 0.0
    %877 = vmatprep.subr.mxu0 0.0
    %878 = vmatpush2.msra.mxu0 0.0
    %879 = vmatprep.subr.mxu0 0.0
    %880 = vmatpush2.msra.mxu0 0.0
    %881 = vmatprep.subr.mxu0 0.0
    %882 = vmatpush2.msra.mxu0 0.0
    %883 = vmatprep.subr.mxu0 0.0
    %884 = vmatpush2.msra.mxu0 0.0
    %885 = vmatprep.subr.mxu0 0.0
    %886 = vmatpush2.msra.mxu0 0.0
    %887 = vmatprep.subr.mxu0 0.0
    %888 = vmatpush2.msra.mxu0 0.0
    %889 = vmatprep.subr.mxu0 0.0
    %890 = vmatpush2.msra.mxu0 0.0
    %891 = vmatprep.subr.mxu0 0.0
    %892 = vmatpush2.msra.mxu0 0.0
    %893 = vmatprep.mubr.f32.mxu0 0.0
    %894 = vmatmul.mubr.f32.gmra.mxu0 %v761
    %v895 = vpop.f32.mrf.mxu0
    %v896 = vadd.f32 %v817, %v895
    %v897 = vpop.f32.mrf.mxu0
    %v898 = vadd.f32 %v821, %v897
    %899 = vmatprep.mubr.f32.mxu0 0.0
    %900 = vmatmul.mubr.f32.gmra.mxu0 %v762
    %v901 = vpop.f32.mrf.mxu0
    %v902 = vadd.f32 %v817, %v901
    %v903 = vpop.f32.mrf.mxu0
    %v904 = vadd.f32 %v821, %v903
    %905 = vdwg.mxu0
    %906 = vmatprep.subr.mxu0 0.0
    %907 = vmatpush1.msra.mxu0 %v810
    %908 = vmatprep.subr.mxu0 0.0
    %909 = vmatpush1.msra.mxu0 %v807
    %910 = vmatprep.subr.mxu0 0.0
    %911 = vmatpush1.msra.mxu0 %v804
    %912 = vmatprep.subr.mxu0 0.0
    %913 = vmatpush1.msra.mxu0 %v801
    %914 = vmatprep.subr.mxu0 0.0
    %915 = vmatpush1.msra.mxu0 %v798
    %916 = vmatprep.subr.mxu0 0.0
    %917 = vmatpush1.msra.mxu0 %v795
    %918 = vmatprep.subr.mxu0 0.0
    %919 = vmatpush1.msra.mxu0 %v792
    %920 = vmatprep.subr.mxu0 0.0
    %921 = vmatpush1.msra.mxu0 %v789
    %922 = vmatprep.subr.mxu0 0.0
    %923 = vmatpush1.msra.mxu0 %v786
    %924 = vmatprep.subr.mxu0 0.0
    %925 = vmatpush1.msra.mxu0 %v783
    %926 = vmatprep.subr.mxu0 0.0
    %927 = vmatpush1.msra.mxu0 %v780
    %928 = vmatprep.subr.mxu0 0.0
    %929 = vmatpush1.msra.mxu0 %v777
    %930 = vmatprep.subr.mxu0 0.0
    %931 = vmatpush1.msra.mxu0 %v774
    %932 = vmatprep.subr.mxu0 0.0
    %933 = vmatpush1.msra.mxu0 %v771
    %934 = vmatprep.subr.mxu0 0.0
    %935 = vmatpush1.msra.mxu0 %v768
    %936 = vmatprep.subr.mxu0 0.0
    %937 = vmatpush1.msra.mxu0 %v765
    %938 = vmatprep.subr.mxu0 0.0
    %939 = vmatpush2.msra.mxu0 0.0
    %940 = vmatprep.subr.mxu0 0.0
    %941 = vmatpush2.msra.mxu0 0.0
    %942 = vmatprep.subr.mxu0 0.0
    %943 = vmatpush2.msra.mxu0 0.0
    %944 = vmatprep.subr.mxu0 0.0
    %945 = vmatpush2.msra.mxu0 0.0
    %946 = vmatprep.subr.mxu0 0.0
    %947 = vmatpush2.msra.mxu0 0.0
    %948 = vmatprep.subr.mxu0 0.0
    %949 = vmatpush2.msra.mxu0 0.0
    %950 = vmatprep.subr.mxu0 0.0
    %951 = vmatpush2.msra.mxu0 0.0
    %952 = vmatprep.subr.mxu0 0.0
    %953 = vmatpush2.msra.mxu0 0.0
    %954 = vmatprep.subr.mxu0 0.0
    %955 = vmatpush2.msra.mxu0 0.0
    %956 = vmatprep.subr.mxu0 0.0
    %957 = vmatpush2.msra.mxu0 0.0
    %958 = vmatprep.subr.mxu0 0.0
    %959 = vmatpush2.msra.mxu0 0.0
    %960 = vmatprep.subr.mxu0 0.0
    %961 = vmatpush2.msra.mxu0 0.0
    %962 = vmatprep.subr.mxu0 0.0
    %963 = vmatpush2.msra.mxu0 0.0
    %964 = vmatprep.subr.mxu0 0.0
    %965 = vmatpush2.msra.mxu0 0.0
    %966 = vmatprep.subr.mxu0 0.0
    %967 = vmatpush2.msra.mxu0 0.0
    %968 = vmatprep.subr.mxu0 0.0
    %969 = vmatpush2.msra.mxu0 0.0
    %970 = vmatprep.mubr.f32.mxu0 0.0
    %971 = vmatmul.mubr.f32.gmra.mxu0 %v761
    %v972 = vpop.f32.mrf.mxu0
    %v973 = vadd.f32 %v825, %v972
    %v974 = vpop.f32.mrf.mxu0
    %975 = vmatprep.mubr.f32.mxu0 0.0
    %976 = vmatmul.mubr.f32.gmra.mxu0 %v762
    %v977 = vpop.f32.mrf.mxu0
    %v978 = vadd.f32 %v825, %v977
    %v979 = vpop.f32.mrf.mxu0
    %980 = vdwg.mxu0
    %v981 = vmin.f32 %v896, 0.0
    %v982 = vmin.f32 %v902, 0.0
    %v983 = vmul.f32 %v981, 1.442695
    %v984 = vpow.pop %v983
    %v985 = vmul.f32 %v982, 1.442695
    %v986 = vpow.pop %v985
    %v987 = vsub.f32 %v984, 1.0
    %v988 = vsub.f32 %v986, 1.0
    %v989 = vmul.f32 %v987, 1.6732632
    %v990 = vmul.f32 %v988, 1.6732632
    %vm991 = vcmp.gt.f32.partialorder %v896, 0.0
    %vm992 = vcmp.gt.f32.partialorder %v902, 0.0
    %v993 = vsel %vm991, %v896, %v989
    %v994 = vsel %vm992, %v902, %v990
    %v995 = vmul.f32 %v993, 1.050701
    %v996 = vmul.f32 %v994, 1.050701
    %v997 = vld [vmem:[#allocation16] sm:$0xff]
    %v998 = vld [vmem:[#allocation16 + $0x8] sm:$0xff]
    %v999 = vld [vmem:[#allocation16 + $0x10] sm:$0xff]
    %v1000 = vld [vmem:[#allocation16 + $0x18] sm:$0xff]
    %v1001 = vld [vmem:[#allocation16 + $0x20] sm:$0xff]
    %v1002 = vld [vmem:[#allocation16 + $0x28] sm:$0xff]
    %v1003 = vld [vmem:[#allocation16 + $0x30] sm:$0xff]
    %v1004 = vld [vmem:[#allocation16 + $0x38] sm:$0xff]
    %v1005 = vld [vmem:[#allocation16 + $0x40] sm:$0xff]
    %v1006 = vld [vmem:[#allocation16 + $0x48] sm:$0xff]
    %v1007 = vld [vmem:[#allocation16 + $0x50] sm:$0xff]
    %v1008 = vld [vmem:[#allocation16 + $0x58] sm:$0xff]
    %v1009 = vld [vmem:[#allocation16 + $0x60] sm:$0xff]
    %v1010 = vld [vmem:[#allocation16 + $0x68] sm:$0xff]
    %v1011 = vld [vmem:[#allocation16 + $0x70] sm:$0xff]
    %v1012 = vld [vmem:[#allocation16 + $0x78] sm:$0xff]
    %v1013 = vld [vmem:[#allocation16 + $0x80] sm:$0xff]
    %v1014 = vld [vmem:[#allocation16 + $0x88] sm:$0xff]
    %v1015 = vld [vmem:[#allocation16 + $0x90] sm:$0xff]
    %v1016 = vld [vmem:[#allocation16 + $0x98] sm:$0xff]
    %v1017 = vld [vmem:[#allocation16 + $0xa0] sm:$0xff]
    %v1018 = vld [vmem:[#allocation16 + $0xa8] sm:$0xff]
    %v1019 = vld [vmem:[#allocation16 + $0xb0] sm:$0xff]
    %v1020 = vld [vmem:[#allocation16 + $0xb8] sm:$0xff]
    %v1021 = vld [vmem:[#allocation16 + $0xc0] sm:$0xff]
    %v1022 = vld [vmem:[#allocation16 + $0xc8] sm:$0xff]
    %v1023 = vld [vmem:[#allocation16 + $0xd0] sm:$0xff]
    %v1024 = vld [vmem:[#allocation16 + $0xd8] sm:$0xff]
    %v1025 = vld [vmem:[#allocation16 + $0xe0] sm:$0xff]
    %v1026 = vld [vmem:[#allocation16 + $0xe8] sm:$0xff]
    %v1027 = vld [vmem:[#allocation16 + $0xf0] sm:$0xff]
    %v1028 = vld [vmem:[#allocation16 + $0xf8] sm:$0xff]
    %1029 = vmatprep.subr.mxu0 %v1028
    %1030 = vmatpush1.msra.mxu0 %v1027
    %1031 = vmatprep.subr.mxu0 %v1026
    %1032 = vmatpush1.msra.mxu0 %v1025
    %1033 = vmatprep.subr.mxu0 %v1024
    %1034 = vmatpush1.msra.mxu0 %v1023
    %1035 = vmatprep.subr.mxu0 %v1022
    %1036 = vmatpush1.msra.mxu0 %v1021
    %1037 = vmatprep.subr.mxu0 %v1020
    %1038 = vmatpush1.msra.mxu0 %v1019
    %1039 = vmatprep.subr.mxu0 %v1018
    %1040 = vmatpush1.msra.mxu0 %v1017
    %1041 = vmatprep.subr.mxu0 %v1016
    %1042 = vmatpush1.msra.mxu0 %v1015
    %1043 = vmatprep.subr.mxu0 %v1014
    %1044 = vmatpush1.msra.mxu0 %v1013
    %1045 = vmatprep.subr.mxu0 %v1012
    %1046 = vmatpush1.msra.mxu0 %v1011
    %1047 = vmatprep.subr.mxu0 %v1010
    %1048 = vmatpush1.msra.mxu0 %v1009
    %1049 = vmatprep.subr.mxu0 %v1008
    %1050 = vmatpush1.msra.mxu0 %v1007
    %1051 = vmatprep.subr.mxu0 %v1006
    %1052 = vmatpush1.msra.mxu0 %v1005
    %1053 = vmatprep.subr.mxu0 %v1004
    %1054 = vmatpush1.msra.mxu0 %v1003
    %1055 = vmatprep.subr.mxu0 %v1002
    %1056 = vmatpush1.msra.mxu0 %v1001
    %1057 = vmatprep.subr.mxu0 %v1000
    %1058 = vmatpush1.msra.mxu0 %v999
    %1059 = vmatprep.subr.mxu0 %v998
    %1060 = vmatpush1.msra.mxu0 %v997
    %1061 = vmatprep.subr.mxu0 0.0
    %1062 = vmatpush2.msra.mxu0 0.0
    %1063 = vmatprep.subr.mxu0 0.0
    %1064 = vmatpush2.msra.mxu0 0.0
    %1065 = vmatprep.subr.mxu0 0.0
    %1066 = vmatpush2.msra.mxu0 0.0
    %1067 = vmatprep.subr.mxu0 0.0
    %1068 = vmatpush2.msra.mxu0 0.0
    %1069 = vmatprep.subr.mxu0 0.0
    %1070 = vmatpush2.msra.mxu0 0.0
    %1071 = vmatprep.subr.mxu0 0.0
    %1072 = vmatpush2.msra.mxu0 0.0
    %1073 = vmatprep.subr.mxu0 0.0
    %1074 = vmatpush2.msra.mxu0 0.0
    %1075 = vmatprep.subr.mxu0 0.0
    %1076 = vmatpush2.msra.mxu0 0.0
    %1077 = vmatprep.subr.mxu0 0.0
    %1078 = vmatpush2.msra.mxu0 0.0
    %1079 = vmatprep.subr.mxu0 0.0
    %1080 = vmatpush2.msra.mxu0 0.0
    %1081 = vmatprep.subr.mxu0 0.0
    %1082 = vmatpush2.msra.mxu0 0.0
    %1083 = vmatprep.subr.mxu0 0.0
    %1084 = vmatpush2.msra.mxu0 0.0
    %1085 = vmatprep.subr.mxu0 0.0
    %1086 = vmatpush2.msra.mxu0 0.0
    %1087 = vmatprep.subr.mxu0 0.0
    %1088 = vmatpush2.msra.mxu0 0.0
    %1089 = vmatprep.subr.mxu0 0.0
    %1090 = vmatpush2.msra.mxu0 0.0
    %1091 = vmatprep.subr.mxu0 0.0
    %1092 = vmatpush2.msra.mxu0 0.0
    %1093 = vmatprep.mubr.f32.mxu0 0.0
    %1094 = vmatmul.mubr.f32.gmra.mxu0 %v995
    %v1095 = vpop.f32.mrf.mxu0
    %v1096 = vadd.f32 %v898, %v1095
    %v1097 = vpop.f32.mrf.mxu0
    %v1098 = vadd.f32 %v973, %v1097
    %1099 = vmatprep.mubr.f32.mxu0 0.0
    %1100 = vmatmul.mubr.f32.gmra.mxu0 %v996
    %v1101 = vpop.f32.mrf.mxu0
    %v1102 = vadd.f32 %v904, %v1101
    %v1103 = vpop.f32.mrf.mxu0
    %v1104 = vadd.f32 %v978, %v1103
    %1105 = vdwg.mxu0
    %s1106 = scalar_lea.vmem [#allocation17], 6
    %v1107 = vld [vmem:[%s1106] ss:$8 sm:$0x3]
    %v1109 = vlaneseq
    %v1110 = vshrl.u32 %v1109, 7
    %v1111 = vsub.s32 0, %v1110
    %v1112 = vrot.slane %v1107, %v1111
    %v1113 = vlaneseq
    %v1114 = vshrl.u32 %v1113, 7
    %v1115 = vsub.s32 1, %v1114
    %v1116 = vrot.slane %v1107, %v1115
    %v1119 = vadd.f32 %v1096, %v1112
    %v1120 = vadd.f32 %v1098, %v1116
    %v1121 = vadd.f32 %v1102, %v1112
    %v1122 = vadd.f32 %v1104, %v1116
    %1123 = vst [vmem:[#allocation19] sm:$0xff] %v1119
    %1124 = vst [vmem:[#allocation19 + $0x8] sm:$0xff] %v1120
    %1125 = vst [vmem:[#allocation19 + $0x10] sm:$0xff] %v1121
    %1126 = vst [vmem:[#allocation19 + $0x18] sm:$0xff] %v1122
    // Predicated region
    $region82: #{tpu_custom_call.1} parent=1 // pred_check
      _
    $region83: #{tpu_custom_call.1} parent=1 // pred_check_branch
      %1128 = sbr.rel (0) target = $region85
    $region84: #{tpu_custom_call.1} parent=1 // pred_region
      %s1130 = ssub.s32 512, 512
      %1131 = vsyncadd [#allocation4], %s1130
      %s1132 = sshll.u32 [#allocation19], 4
      %s1133 = int_to_ptr.vmem [resolvable:$true] %s1132
      %1138 = dma.vmem_to_hbm [thread:$0]  %s1133, 512, %s10, [#allocation4], 256, 256, 16
    $region85: #{tpu_custom_call.1} parent=1 // pred_fallthru
      _
    // Predicated region
    $region86: #{tpu_custom_call.1} parent=1 // pred_check
      _
    $region87: #{tpu_custom_call.1} parent=1 // pred_check_branch
      %1140 = sbr.rel (0) target = $region89
    $region88: #{tpu_custom_call.1} parent=1 // pred_region
      %s1142 = ssub.s32 512, 512
      %1143 = vsyncadd [#allocation21], %s1142
      %s1144 = sshll.u32 [#allocation20], 4
      %s1145 = int_to_ptr.vmem [resolvable:$true] %s1144
      %1150 = dma.vmem_to_hbm [thread:$0]  %s1145, 512, %s11, [#allocation21], 256, 256, 16
    $region89: #{tpu_custom_call.1} parent=1 // pred_fallthru
      _
    // Predicated region
    $region90: #{tpu_custom_call.1} parent=1 // pred_check
      _
    $region91: #{tpu_custom_call.1} parent=1 // pred_check_branch
      %1152 = sbr.rel (0) target = $region93
    $region92: #{tpu_custom_call.1} parent=1 // pred_region
      %1153 = dma.done [#allocation4], 512
    $region93: #{tpu_custom_call.1} parent=1 // pred_fallthru
      _
    // Predicated region
    $region94: #{tpu_custom_call.1} parent=1 // pred_check
      _
    $region95: #{tpu_custom_call.1} parent=1 // pred_check_branch
      %1155 = sbr.rel (0) target = $region97
    $region96: #{tpu_custom_call.1} parent=1 // pred_region
      %1156 = dma.done [#allocation21], 512
    $region97: #{tpu_custom_call.1} parent=1 // pred_fallthru
      _
    %1157 = vsyncpa [#allocation3], 1
    %1158 = vsyncpa [#allocation6], 1
    %1159 = vsyncpa [#allocation9], 1
    %1160 = vsyncpa [#allocation12], 1
    %1161 = vsyncpa [#allocation15], 1
    %1162 = vsyncpa [#allocation18], 1
    %1163 = vsyncpa [#allocation4], 1
    %1164 = vsyncpa [#allocation21], 1

</llo_original>
